<compile_context>
chip_gen: v5e
topology: v5e:2x2
jax: 0.10.0
libtpu: 0.0.40
codegen_flags: <defaults>
</compile_context>

<pallas_src>
import functools
import itertools

import jax
import jax.numpy as jnp
import numpy as np
from jax.experimental import pallas as pl
from jax.experimental.pallas import tpu as pltpu

# ----------------------------------------------------------------------------- tunables
_TILE_BUDGET = 24 * 1024 * 1024   # per-grid-step VMEM (double-buffered operands + acc)
_VMEM_LIMIT = 40 * 1024 * 1024    # scoped VMEM limit; < 64 MiB physical on v7x
_STEP_S = 0.35e-6                 # measured per-grid-step overhead
_HBM_BPS = 1.2e12                 # rough HBM BW for ranking candidates
_MXU_FLOPS = 4.0e14               # rough MXU throughput for ranking candidates


# ----------------------------------------------------------------------------- utils
def _round_up(x, m):
    return (x + m - 1) // m * m


@functools.lru_cache(maxsize=None)
def _choose_tiles(m, kp, np_, has_addend):
    """Pick (tm, tk, tn, mp) minimising a rough cost model under a VMEM budget."""
    tm_cands = {_round_up(m, 8)}                         # single full-M tile
    for t in (256, 512, 1024, 2048, 4096):
        if t < m:
            tm_cands.add(t)
    if m > 1024 and m % 8 == 0:                          # exact divisors: no M-pad copy
        for d in range(8, min(m, 4096) + 1, 8):
            if m % d == 0:
                tm_cands.add(d)
    tk_cands = [d for d in range(128, kp + 1, 128) if kp % d == 0]
    tn_cands = [d for d in range(128, np_ + 1, 128) if np_ % d == 0]

    best_key, best = None, None
    for tm in sorted(tm_cands):
        mp = _round_up(m, tm)
        for tn in tn_cands:
            for tk in tk_cands:
                # double-buffered A/W/out (+addend), f32 acc scratch, bias
                step_bytes = (2 * tm * tk * 2 + 2 * tk * tn * 2 + 2 * tm * tn * 2
                              + tm * tn * 4 + 2 * tn * 4)
                if has_addend:
                    step_bytes += 2 * tm * tn * 2
                if step_bytes > _TILE_BUDGET:
                    continue
                mg, ng, kg = mp // tm, np_ // tn, kp // tk
                steps = mg * ng * kg
                traffic = (mp * kp * 2 * ng + kp * np_ * 2 * mg
                           + mp * np_ * 2 * (2 if has_addend else 1))
                if mp != m:
                    traffic += 2 * m * kp * 2            # cost of the jnp.pad copy of A
                cost = (steps * _STEP_S + traffic / _HBM_BPS
                        + 2.0 * mp * kp * np_ / _MXU_FLOPS)
                if mg * ng == 1:                          # prefer >=2 parallel blocks (megacore)
                    cost *= 1.05
                key = (cost, -tk, -tn, -tm)
                if best_key is None or key < best_key:
                    best_key, best = key, (tm, tk, tn, mp)
    assert best is not None, (m, kp, np_)
    return best


# ----------------------------------------------------------------------------- kernels
def _mm_kernel(a_ref, w_ref, b_ref, o_ref, acc_ref, *, relu):
    """o = A @ W + bias (optional ReLU). bf16 inputs, f32 accumulation."""
    k = pl.program_id(2)

    @pl.when(k == 0)
    def _():
        acc_ref[...] = jnp.zeros_like(acc_ref)

    acc_ref[...] += jnp.dot(a_ref[...], w_ref[...], preferred_element_type=jnp.float32)

    @pl.when(k == pl.num_programs(2) - 1)
    def _():
        y = acc_ref[...] + b_ref[...]
        if relu:
            y = jnp.maximum(y, 0.0)
        o_ref[...] = y.astype(o_ref.dtype)


def _mm_add_kernel(a_ref, w_ref, b_ref, r_ref, o_ref, acc_ref, *, relu):
    """o = A @ W + bias + addend (fused skip-connection add)."""
    k = pl.program_id(2)

    @pl.when(k == 0)
    def _():
        acc_ref[...] = jnp.zeros_like(acc_ref)

    acc_ref[...] += jnp.dot(a_ref[...], w_ref[...], preferred_element_type=jnp.float32)

    @pl.when(k == pl.num_programs(2) - 1)
    def _():
        y = acc_ref[...] + b_ref[...] + r_ref[...].astype(jnp.float32)
        if relu:
            y = jnp.maximum(y, 0.0)
        o_ref[...] = y.astype(o_ref.dtype)


def _pool_kernel(x_ref, o_ref, *, c):
    """MaxPool 2x2/2. x block: (2*tr, wo, 2c) -> out block (tr, wo, c)."""
    x = x_ref[...]                                       # (2*tr, wo, 2c)
    x = jnp.maximum(x[:, :, :c], x[:, :, c:])            # max over width phase
    tr2, wsz, _ = x.shape
    x = x.reshape(tr2 // 2, 2, wsz, c)
    o_ref[...] = jnp.maximum(x[:, 0], x[:, 1])           # max over height phase


# ----------------------------------------------------------------------------- pallas_call builders (cached per shape)
@functools.lru_cache(maxsize=None)
def _build_matmul(mp, kp, np_, tm, tk, tn, relu, has_addend, out_dtype_name):
    out_dtype = jnp.dtype(out_dtype_name)
    kernel = functools.partial(_mm_add_kernel if has_addend else _mm_kernel, relu=relu)
    in_specs = [
        pl.BlockSpec((tm, tk), lambda m, n, k: (m, k)),
        pl.BlockSpec((tk, tn), lambda m, n, k: (k, n)),
        pl.BlockSpec((1, tn), lambda m, n, k: (0, n)),
    ]
    if has_addend:
        in_specs.append(pl.BlockSpec((tm, tn), lambda m, n, k: (m, n)))
    mg, ng = mp // tm, np_ // tn
    bytes_accessed = (mp * kp * 2 * ng + kp * np_ * 2 * mg + np_ * 4
                      + mp * np_ * out_dtype.itemsize
                      + (mp * np_ * 2 if has_addend else 0))
    return pl.pallas_call(
        kernel,
        out_shape=jax.ShapeDtypeStruct((mp, np_), out_dtype),
        grid_spec=pltpu.PrefetchScalarGridSpec(
            num_scalar_prefetch=0,
            grid=(mg, ng, kp // tk),
            in_specs=in_specs,
            out_specs=pl.BlockSpec((tm, tn), lambda m, n, k: (m, n)),
            scratch_shapes=[pltpu.VMEM((tm, tn), jnp.float32)],
        ),
        compiler_params=pltpu.CompilerParams(
            dimension_semantics=("parallel", "parallel", "arbitrary"),
            vmem_limit_bytes=_VMEM_LIMIT),
        cost_estimate=pl.CostEstimate(
            flops=int(2 * mp * kp * np_), transcendentals=0,
            bytes_accessed=int(bytes_accessed)),
    )


@functools.lru_cache(maxsize=None)
def _build_pool(nrows_out, wo, c, tr):
    kernel = functools.partial(_pool_kernel, c=c)
    return pl.pallas_call(
        kernel,
        out_shape=jax.ShapeDtypeStruct((nrows_out, wo, c), jnp.bfloat16),
        grid_spec=pltpu.PrefetchScalarGridSpec(
            num_scalar_prefetch=0,
            grid=(nrows_out // tr,),
            in_specs=[pl.BlockSpec((2 * tr, wo, 2 * c), lambda i: (i, 0, 0))],
            out_specs=pl.BlockSpec((tr, wo, c), lambda i: (i, 0, 0)),
        ),
        compiler_params=pltpu.CompilerParams(
            dimension_semantics=("parallel",),
            vmem_limit_bytes=_VMEM_LIMIT),
    )


# ----------------------------------------------------------------------------- op wrappers
def matmul_bias_act(a, w_pad, bias_pad, n_true, relu, addend=None, out_dtype=jnp.bfloat16):
    """a: (M, Kp) bf16 (K already zero-padded).  w_pad: (Kp, Np) bf16.  bias: (1, Np) f32."""
    m, kp = a.shape
    kp2, np_ = w_pad.shape
    assert kp == kp2, (kp, kp2)
    has_addend = addend is not None
    tm, tk, tn, mp = _choose_tiles(m, kp, np_, has_addend)

    a = a.astype(jnp.bfloat16)
    if mp != m:
        a = jnp.pad(a, ((0, mp - m), (0, 0)))            # zero rows: never garbage
    args = [a, w_pad, bias_pad]
    if has_addend:
        add = addend.astype(jnp.bfloat16)
        if add.shape != (mp, np_):
            add = jnp.pad(add, ((0, mp - add.shape[0]), (0, np_ - add.shape[1])))
        args.append(add)

    fn = _build_matmul(mp, kp, np_, tm, tk, tn, bool(relu), has_addend,
                       jnp.dtype(out_dtype).name)
    out = fn(*args)
    if (mp, np_) != (m, n_true):
        out = out[:m, :n_true]
    return out


def _im2col(x, kh, kw, stride, pad, kp):
    """x: NHWC bf16 -> (B, Ho, Wo, Kp) with the K zero-slab folded into the concat."""
    b, h, w, c = x.shape
    if pad:
        x = jnp.pad(x, ((0, 0), (pad, pad), (pad, pad), (0, 0)))
    hp, wp = h + 2 * pad, w + 2 * pad
    ho = (hp - kh) // stride + 1
    wo = (wp - kw) // stride + 1
    th = stride * (ho - 1) + 1
    tw = stride * (wo - 1) + 1
    cols = [x[:, ky:ky + th:stride, kx:kx + tw:stride, :]
            for ky in range(kh) for kx in range(kw)]
    k = kh * kw * c
    if kp > k:
        cols.append(jnp.zeros((b, ho, wo, kp - k), x.dtype))
    return jnp.concatenate(cols, axis=-1), ho, wo


def conv2d(x, layer, *, relu, addend=None, out_dtype=jnp.bfloat16):
    """x: NHWC bf16.  layer: pre-padded weight (Kp, Np) bf16, bias (1, Np) f32."""
    kh, kw, stride, pad = layer["kh"], layer["kw"], layer["stride"], layer["pad"]
    kp, n = layer["kp"], layer["n"]
    b, h, w, c = x.shape
    if kh == 1 and kw == 1 and stride == 1 and pad == 0:
        ho, wo = h, w
        a = x.reshape(b * ho * wo, c)
        if c != kp:
            a = jnp.pad(a, ((0, 0), (0, kp - c)))
    else:
        cols, ho, wo = _im2col(x, kh, kw, stride, pad, kp)
        a = cols.reshape(b * ho * wo, kp)
    add2 = None if addend is None else addend.reshape(b * ho * wo, -1)
    y = matmul_bias_act(a, layer["w"], layer["b"], n, relu, addend=add2,
                        out_dtype=out_dtype)
    return y.reshape(b, ho, wo, n)


def conv_transpose2d(x, layer, out_dtype=jnp.bfloat16):
    """ConvTranspose2d(k=2s, stride=s, bias=False) via sub-pixel decomposition:
    one 2x2 conv (pad=1) producing s*s*C channels, interleaved into the output."""
    s, co = layer["s"], layer["cout"]
    b, h, w, _ = x.shape
    y = conv2d(x, layer, relu=False, out_dtype=out_dtype)       # (b, h+1, w+1, s*s*co)
    y = y.reshape(b, h + 1, w + 1, s, s, co)
    y = jnp.transpose(y, (0, 1, 3, 2, 4, 5))
    return y.reshape(b, (h + 1) * s, (w + 1) * s, co)


def _pick_pool_rows(nrows_out, wo, c, budget=8 * 1024 * 1024):
    """Largest divisor of nrows_out whose input block stays under `budget` bytes."""
    row_bytes = 2 * _round_up(wo, 8) * _round_up(2 * c, 128) * 2
    cap = max(1, budget // row_bytes)
    best = 1
    for d in range(1, min(nrows_out, cap) + 1):
        if nrows_out % d == 0:
            best = d
    return best


def maxpool2x2_ceil(x):
    """nn.MaxPool2d(2, stride=2, ceil_mode=True) on NHWC bf16 (single-pass kernel)."""
    b, h, w, c = x.shape
    ho, wo = -(-h // 2), -(-w // 2)
    he, we = 2 * ho, 2 * wo
    if (he, we) != (h, w):
        x = jnp.pad(x, ((0, 0), (0, he - h), (0, we - w), (0, 0)),
                    constant_values=float("-inf"))
    xr = x.reshape(b * he, wo, 2 * c)                    # free reshape, read once
    nrows_out = b * ho
    tr = _pick_pool_rows(nrows_out, wo, c)
    out = _build_pool(nrows_out, wo, c, tr)(xr)
    return out.reshape(b, ho, wo, c)


# ----------------------------------------------------------------------------- parameters (deterministic synthetic init)
def _key_stream(key):
    cnt = itertools.count()

    def nk():
        return jax.random.fold_in(key, next(cnt))

    return nk


def _conv_layer(nk, cin, cout, k, pad, in_scale=1.0):
    fan_in = cin * k * k
    w = jax.random.normal(nk(), (cout, cin, k, k), jnp.float32) * np.sqrt(2.0 / fan_in)
    b = 0.01 * jax.random.normal(nk(), (cout,), jnp.float32)
    wmat = jnp.transpose(w, (2, 3, 1, 0)).reshape(k * k * cin, cout) * in_scale
    kraw = k * k * cin
    kp = _round_up(kraw, 128)
    np_ = _round_up(cout, 128)
    w_pad = jnp.pad(wmat, ((0, kp - kraw), (0, np_ - cout))).astype(jnp.bfloat16)
    b_pad = jnp.pad(b, (0, np_ - cout)).reshape(1, np_)
    return {"w": w_pad, "b": b_pad, "n": cout, "kp": kp, "np": np_,
            "kh": k, "kw": k, "stride": 1, "pad": pad}


def _bilinear_upsample_weight(in_channels, out_channels, kernel_size):
    factor = (kernel_size + 1) // 2
    center = factor - 1 if kernel_size % 2 == 1 else factor - 0.5
    og = np.ogrid[:kernel_size, :kernel_size]
    filt = (1 - abs(og[0] - center) / factor) * (1 - abs(og[1] - center) / factor)
    weight = np.zeros((in_channels, out_channels, kernel_size, kernel_size), np.float64)
    weight[range(in_channels), range(out_channels), :, :] = filt
    return weight.astype(np.float32)


def _deconv_layer(nc, k, s):
    """Sub-pixel weights for ConvTranspose2d(nc, nc, k, stride=s, bias=False), k == 2s.
    out[q*s + r] = x[q] * W[r] + x[q-1] * W[r+s]  (per spatial dim), so a 2x2 conv
    over the 1-padded input with weight[(uy,ux,ci) -> (ry,rx,co)]."""
    assert k == 2 * s
    w_t = _bilinear_upsample_weight(nc, nc, k)                   # (cin, cout, k, k)
    wmat = np.zeros((2, 2, nc, s, s, nc), np.float32)
    for uy in range(2):
        py = s if uy == 0 else 0                                 # uy==0 -> x[q-1] -> W[r+s]
        for ux in range(2):
            px = s if ux == 0 else 0
            blk = w_t[:, :, py:py + s, px:px + s]                # (ci, co, ry, rx)
            wmat[uy, ux] = np.transpose(blk, (0, 2, 3, 1))       # (ci, ry, rx, co)
    wmat = wmat.reshape(4 * nc, s * s * nc)
    kraw, n = 4 * nc, s * s * nc
    kp, np_ = _round_up(kraw, 128), _round_up(n, 128)
    w_pad = np.zeros((kp, np_), np.float32)
    w_pad[:kraw, :n] = wmat
    return {"w": jnp.asarray(w_pad, jnp.bfloat16),
            "b": jnp.zeros((1, np_), jnp.float32),
            "n": n, "kp": kp, "np": np_,
            "kh": 2, "kw": 2, "stride": 1, "pad": 1, "s": s, "cout": nc}


def init_vgg16_fcn_params(key, num_classes=16):
    nk = _key_stream(key)
    p = {}
    p["conv1_1"] = _conv_layer(nk, 3, 64, 3, pad=100)
    p["conv1_2"] = _conv_layer(nk, 64, 64, 3, pad=1)
    p["conv2_1"] = _conv_layer(nk, 64, 128, 3, pad=1)
    p["conv2_2"] = _conv_layer(nk, 128, 128, 3, pad=1)
    p["conv3_1"] = _conv_layer(nk, 128, 256, 3, pad=1)
    p["conv3_2"] = _conv_layer(nk, 256, 256, 3, pad=1)
    p["conv3_3"] = _conv_layer(nk, 256, 256, 3, pad=1)
    p["conv4_1"] = _conv_layer(nk, 256, 512, 3, pad=1)
    p["conv4_2"] = _conv_layer(nk, 512, 512, 3, pad=1)
    p["conv4_3"] = _conv_layer(nk, 512, 512, 3, pad=1)
    p["conv5_1"] = _conv_layer(nk, 512, 512, 3, pad=1)
    p["conv5_2"] = _conv_layer(nk, 512, 512, 3, pad=1)
    p["conv5_3"] = _conv_layer(nk, 512, 512, 3, pad=1)
    p["fc6"] = _conv_layer(nk, 512, 4096, 7, pad=0)
    p["fc7"] = _conv_layer(nk, 4096, 4096, 1, pad=0)
    p["score_fr"] = _conv_layer(nk, 4096, num_classes, 1, pad=0)
    # The reference scales the *inputs* of these 1x1 convs by 0.01 / 0.0001;
    # fold the scale into the weights (exactly equivalent, saves a pass).
    p["score_pool4"] = _conv_layer(nk, 512, num_classes, 1, pad=0, in_scale=0.01)
    p["score_pool3"] = _conv_layer(nk, 256, num_classes, 1, pad=0, in_scale=1e-4)
    p["upscore2"] = _deconv_layer(num_classes, 4, 2)
    p["upscore_pool4"] = _deconv_layer(num_classes, 4, 2)
    p["upscore8"] = _deconv_layer(num_classes, 16, 8)
    return p


# ----------------------------------------------------------------------------- forward
def vgg16_fcn_forward(params, x_nchw):
    in_h, in_w = x_nchw.shape[2], x_nchw.shape[3]
    x = jnp.transpose(x_nchw, (0, 2, 3, 1)).astype(jnp.bfloat16)  # NHWC

    h = conv2d(x, params["conv1_1"], relu=True)
    h = conv2d(h, params["conv1_2"], relu=True)
    h = maxpool2x2_ceil(h)
    h = conv2d(h, params["conv2_1"], relu=True)
    h = conv2d(h, params["conv2_2"], relu=True)
    h = maxpool2x2_ceil(h)
    h = conv2d(h, params["conv3_1"], relu=True)
    h = conv2d(h, params["conv3_2"], relu=True)
    h = conv2d(h, params["conv3_3"], relu=True)
    pool3 = maxpool2x2_ceil(h)
    h = conv2d(pool3, params["conv4_1"], relu=True)
    h = conv2d(h, params["conv4_2"], relu=True)
    h = conv2d(h, params["conv4_3"], relu=True)
    pool4 = maxpool2x2_ceil(h)
    h = conv2d(pool4, params["conv5_1"], relu=True)
    h = conv2d(h, params["conv5_2"], relu=True)
    h = conv2d(h, params["conv5_3"], relu=True)
    h = maxpool2x2_ceil(h)

    h = conv2d(h, params["fc6"], relu=True)       # drop6: eval-mode identity
    h = conv2d(h, params["fc7"], relu=True)       # drop7: eval-mode identity
    h = conv2d(h, params["score_fr"], relu=False)
    up2 = conv_transpose2d(h, params["upscore2"])

    # upscore2 + crop(score_pool4(pool4 * 0.01)): crop commutes with the 1x1
    # conv, the 0.01 is folded into the weight, and the add is fused in-kernel.
    p4c = pool4[:, 5:5 + up2.shape[1], 5:5 + up2.shape[2], :]
    h = conv2d(p4c, params["score_pool4"], relu=False, addend=up2)
    up_p4 = conv_transpose2d(h, params["upscore_pool4"])

    p3c = pool3[:, 9:9 + up_p4.shape[1], 9:9 + up_p4.shape[2], :]
    h = conv2d(p3c, params["score_pool3"], relu=False, addend=up_p4)
    h = conv_transpose2d(h, params["upscore8"])

    h = h[:, 31:31 + in_h, 31:31 + in_w, :]
    return jnp.transpose(h, (0, 3, 1, 2)).astype(jnp.float32)


# ----------------------------------------------------------------------------- main
if __name__ == "__main__":
    root = jax.random.PRNGKey(0)
    params = init_vgg16_fcn_params(jax.random.fold_in(root, 1), num_classes=16)
    x = jax.random.normal(jax.random.fold_in(root, 0), (2, 3, 16, 16), jnp.float32)

    out = vgg16_fcn_forward(params, x)
    out = jax.block_until_ready(out)

    assert out.shape == (2, 16, 16, 16), f"bad output shape {out.shape}"
    assert bool(jnp.all(jnp.isfinite(out))), "non-finite values in output"
    print("KERNEL_OK")
</pallas_src>

<mosaic_0001>
module attributes {stable_mosaic.version = 11 : i64} {
  func.func @_mm_kernel(%arg0: i32, %arg1: i32, %arg2: i32, %arg3: memref<856x128xbf16, #tpu.memory_space<vmem>>, %arg4: memref<128x128xbf16, #tpu.memory_space<vmem>>, %arg5: memref<1x128xf32, #tpu.memory_space<vmem>>, %arg6: memref<856x128xbf16, #tpu.memory_space<vmem>>, %arg7: memref<856x128xf32, #tpu.memory_space<vmem>>) attributes {dimension_semantics = [#tpu.dimension_semantics<parallel>, #tpu.dimension_semantics<parallel>, #tpu.dimension_semantics<arbitrary>], iteration_bounds = array<i64: 107, 1, 1>, scalar_prefetch = 0 : i64, scratch_operands = 1 : i64, tpu.core_type = #tpu.core_type<tc>, window_params = [{transform_indices = @transform_0, window_bounds = array<i64: 856, 128>}, {transform_indices = @transform_1, window_bounds = array<i64: 128, 128>}, {transform_indices = @transform_2, window_bounds = array<i64: 1, 128>}, {transform_indices = @transform_3, window_bounds = array<i64: 856, 128>}]} {
    %c0_i32 = arith.constant 0 : i32
    %0 = arith.cmpi eq, %arg2, %c0_i32 : i32
    %1 = arith.extui %0 : i1 to i32
    %c0_i32_0 = arith.constant 0 : i32
    %2 = arith.cmpi ne, %1, %c0_i32_0 : i32
    scf.if %2 {
      %cst_10 = arith.constant 0.000000e+00 : f32
      %12 = vector.broadcast %cst_10 : f32 to vector<856x128xf32>
      %c0_11 = arith.constant 0 : index
      %c0_12 = arith.constant 0 : index
      %13 = vector.load %arg7[%c0_11, %c0_12] : memref<856x128xf32, #tpu.memory_space<vmem>>, vector<856x128xf32>
      tpu.vector_store %arg7[%c0_11, %c0_12], %12 {strides = array<i32>} : memref<856x128xf32, #tpu.memory_space<vmem>>, vector<856x128xf32>,
    } else {
    }
    %c0 = arith.constant 0 : index
    %c0_1 = arith.constant 0 : index
    %3 = vector.load %arg7[%c0, %c0_1] : memref<856x128xf32, #tpu.memory_space<vmem>>, vector<856x128xf32>
    %c0_2 = arith.constant 0 : index
    %c0_3 = arith.constant 0 : index
    %4 = vector.load %arg3[%c0_2, %c0_3] : memref<856x128xbf16, #tpu.memory_space<vmem>>, vector<856x128xbf16>
    %c0_4 = arith.constant 0 : index
    %c0_5 = arith.constant 0 : index
    %5 = vector.load %arg4[%c0_4, %c0_5] : memref<128x128xbf16, #tpu.memory_space<vmem>>, vector<128x128xbf16>
    %cst = arith.constant dense<0.000000e+00> : vector<856x128xf32>
    %6 = tpu.matmul %4, %5, %cst {dimension_numbers = #tpu.dot_dimension_numbers<[1], [0], [0], [1], [0, 0, 1, 1], [], []>} : vector<856x128xbf16>, vector<128x128xbf16>, vector<856x128xf32> -> vector<856x128xf32>
    %7 = arith.addf %3, %6 : vector<856x128xf32>
    %c0_6 = arith.constant 0 : index
    %c0_7 = arith.constant 0 : index
    %8 = vector.load %arg7[%c0_6, %c0_7] : memref<856x128xf32, #tpu.memory_space<vmem>>, vector<856x128xf32>
    tpu.vector_store %arg7[%c0_6, %c0_7], %7 {strides = array<i32>} : memref<856x128xf32, #tpu.memory_space<vmem>>, vector<856x128xf32>,
    %c0_i32_8 = arith.constant 0 : i32
    %9 = arith.cmpi eq, %arg2, %c0_i32_8 : i32
    %10 = arith.extui %9 : i1 to i32
    %c0_i32_9 = arith.constant 0 : i32
    %11 = arith.cmpi ne, %10, %c0_i32_9 : i32
    scf.if %11 {
      %c0_10 = arith.constant 0 : index
      %c0_11 = arith.constant 0 : index
      %12 = vector.load %arg7[%c0_10, %c0_11] : memref<856x128xf32, #tpu.memory_space<vmem>>, vector<856x128xf32>
      %c0_12 = arith.constant 0 : index
      %c0_13 = arith.constant 0 : index
      %13 = vector.load %arg5[%c0_12, %c0_13] : memref<1x128xf32, #tpu.memory_space<vmem>>, vector<1x128xf32>
      %14 = vector.broadcast %13 : vector<1x128xf32> to vector<856x128xf32>
      %15 = arith.addf %12, %14 : vector<856x128xf32>
      %cst_14 = arith.constant 0.000000e+00 : f32
      %16 = vector.broadcast %cst_14 : f32 to vector<856x128xf32>
      %17 = arith.maximumf %15, %16 : vector<856x128xf32>
      %18 = arith.truncf %17 : vector<856x128xf32> to vector<856x128xbf16>
      %c0_15 = arith.constant 0 : index
      %c0_16 = arith.constant 0 : index
      %19 = vector.load %arg6[%c0_15, %c0_16] : memref<856x128xbf16, #tpu.memory_space<vmem>>, vector<856x128xbf16>
      tpu.vector_store %arg6[%c0_15, %c0_16], %18 {strides = array<i32>} : memref<856x128xbf16, #tpu.memory_space<vmem>>, vector<856x128xbf16>,
    } else {
    }
    return
  }
  func.func @transform_0(%arg0: i32, %arg1: i32, %arg2: i32) -> (i32, i32) {
    %c0_i32 = arith.constant 0 : i32
    return %arg0, %arg2 : i32, i32
  }
  func.func @transform_1(%arg0: i32, %arg1: i32, %arg2: i32) -> (i32, i32) {
    %c0_i32 = arith.constant 0 : i32
    return %arg2, %arg1 : i32, i32
  }
  func.func @transform_2(%arg0: i32, %arg1: i32, %arg2: i32) -> (i32, i32) {
    %c0_i32 = arith.constant 0 : i32
    %c0_i32_0 = arith.constant 0 : i32
    return %c0_i32, %arg1 : i32, i32
  }
  func.func @transform_3(%arg0: i32, %arg1: i32, %arg2: i32) -> (i32, i32) {
    %c0_i32 = arith.constant 0 : i32
    return %arg0, %arg1 : i32, i32
  }
}

</mosaic_0001>

<llo_original>
// kernel: tpu_custom_call.1
$region0: #{tpu_custom_call.1}
  #allocation0 [shape = 'u32[]', space=smem, size = 0x4, offset = 0x4, fixed_abs, tag = 'smem constant byte address 0x4 - core index']
  #allocation1 [shape = 'u32[72,128]{1,0:T(1,128)}', space=vmem, size = 0x9000, scoped, tag = 'internal scratch']
  #allocation2 [shape = 'f32[856,128]{1,0:T(8,128)}', space=vmem, size = 0x6b000, scoped, tag = 'scratch operand']
  %s0 = inlined_call_operand.hbm [shape: bf16[91592,128], index: 0, kind: input, shape index: {}]
  %s1 = inlined_call_operand.hbm [shape: bf16[128,128], index: 1, kind: input, shape index: {}]
  %s2 = inlined_call_operand.hbm [shape: f32[1,128], index: 2, kind: input, shape index: {}]
  %s3 = inlined_call_operand.hbm [shape: bf16[91592,128], index: 3, kind: output, shape index: {}]
  %s4 = sld [smem:[#allocation0]]
  $region65: #{tpu_custom_call.1} parent=0
    _
  %s6 = ssub.s32 1, %s4
  %s7 = scalar_select 0, %s6, %s4
  $region1: #{tpu_custom_call.1} parent=0
    #allocation3 [shape = 'u8[438272]{0}', space=vmem, size = 0x6b000, scoped, tag = 'input window, operand 0']
    #allocation4 [shape = 's32[2]{0}', space=sflag, size = 0x8, scoped, tag = 'scoped memory for tpu_custom_call.1']
    #allocation5 [shape = 's32[2]{0}', space=sflag, size = 0x8, scoped, tag = 'scoped memory for tpu_custom_call.1']
    #allocation6 [shape = 'u8[32768]{0}', space=vmem, size = 0x8000, scoped, tag = 'input window, operand 1, single buffered']
    #allocation7 [shape = 's32[1]{0}', space=sflag, size = 0x4, scoped, tag = 'scoped memory for tpu_custom_call.1']
    #allocation8 [shape = 'u8[512]{0}', space=vmem, size = 0x400, scoped, tag = 'input window, operand 2, single buffered']
    #allocation9 [shape = 'u8[438272]{0}', space=vmem, size = 0x6b000, scoped, tag = 'output window, operand 0']
    %8 = vsyncpa [#allocation4], 0
    %s9 = scalar_lea.sflag [#allocation4], 1
    %10 = vsyncpa %s9, 0
    %11 = vsyncpa [#allocation7], 0
    %12 = vsyncpa [#allocation5], 0
    %s13 = scalar_lea.sflag [#allocation5], 1
    %14 = vsyncpa %s13, 0
    loop: start=0, step=1, limit=109
    $region2: #{tpu_custom_call.1} parent=1 // loop_pre_header
      _
    $region3: #{tpu_custom_call.1} parent=1 // loop_header
      %s16 = sphi 0, %s20
      %p17 = scmp.ge.s32.totalorder %s16, 109
      %s23 = sphi 0, %s42
      %s24 = sphi 0, %s38
      %s25 = sphi 0, %s34
      %s26 = sphi 0, %s23
      %s27 = sphi 0, %s24
      %s28 = sphi 0, %s25
      %s29 = sphi 0, %s26
      %s30 = sphi 0, %s27
      %s31 = sphi 0, %s28
      %s47 = sphi 0, %s49
      %s50 = sphi 0, %s47
      %s51 = sphi 0, %s50
      %s67 = sphi 0, %s51
      %s75 = sphi 0, %s77
      %s78 = sphi 0, %s75
      %s79 = sphi 0, %s78
      %s95 = sphi 0, %s79
      %s101 = sphi 0, %s103
      %s104 = sphi 0, %s101
      %s105 = sphi 0, %s104
      %s121 = sphi 0, %s105
      %s129 = sphi 0, %s131
      %s132 = sphi 0, %s129
      %s133 = sphi 0, %s132
      %s149 = sphi 0, %s133
    $region4: #{tpu_custom_call.1} parent=1 // loop_header_branch
      %19 = sbr.rel (%p17) target = $region8
    $region5: #{tpu_custom_call.1} parent=1 // loop_body
      %s21 = ssub.s32 %s16, 1
      %s22 = ssub.s32 %s16, 2
      %s32 = sadd.s32 1, %s25
      %p33 = scmp.ge.s32.totalorder %s32, 1
      %s34 = scalar_select %p33, 0, %s32
      %s35 = sadd.s32 1, %s24
      %s36 = scalar_select %p33, %s35, %s24
      %p37 = scmp.ge.s32.totalorder %s36, 1
      %s38 = scalar_select %p37, 0, %s36
      %s39 = sadd.s32 1, %s23
      %s40 = scalar_select %p37, %s39, %s23
      %p41 = scmp.ge.s32.totalorder %s40, 107
      %s42 = scalar_select %p41, 0, %s40
      %s43 = ssub.s32 %s23, %s42
      %s44 = ssub.s32 %s25, %s34
      %s45 = sor.u32 %s43, %s44
      %p46 = scmp.eq.s32.totalorder %s45, 0
      %s48 = sadd.s32 %s47, 1
      %s49 = scalar_select %p46, %s47, %s48
      %p52 = pneg %p46
      %p53 = scmp.eq.s32.totalorder %s16, 106
      %p54 = por %p52, %p53
      %p55 = scmp.ne.s32.totalorder %s47, %s50
      %p56 = scmp.eq.s32.totalorder %s16, 0
      %p57 = por %p55, %p56
      %p58 = scmp.ne.s32.totalorder %s47, %s50
      %p59 = scmp.eq.s32.totalorder %s21, 106
      %p60 = por %p58, %p59
      %p61 = scmp.ne.s32.totalorder %s50, %s51
      %p62 = scmp.eq.s32.totalorder %s21, 0
      %p63 = por %p61, %p62
      %p64 = scmp.ne.s32.totalorder %s50, %s51
      %p65 = scmp.eq.s32.totalorder %s22, 106
      %p66 = por %p64, %p65
      %p68 = scmp.ne.s32.totalorder %s51, %s67
      %p69 = scmp.eq.s32.totalorder %s22, 0
      %p70 = por %p68, %p69
      %s71 = ssub.s32 %s25, %s34
      %s72 = ssub.s32 %s24, %s38
      %s73 = sor.u32 %s71, %s72
      %p74 = scmp.eq.s32.totalorder %s73, 0
      %s76 = sadd.s32 %s75, 1
      %s77 = scalar_select %p74, %s75, %s76
      %p80 = pneg %p74
      %p81 = scmp.eq.s32.totalorder %s16, 106
      %p82 = por %p80, %p81
      %p83 = scmp.ne.s32.totalorder %s75, %s78
      %p84 = scmp.eq.s32.totalorder %s16, 0
      %p85 = por %p83, %p84
      %p86 = scmp.ne.s32.totalorder %s75, %s78
      %p87 = scmp.eq.s32.totalorder %s21, 106
      %p88 = por %p86, %p87
      %p89 = scmp.ne.s32.totalorder %s78, %s79
      %p90 = scmp.eq.s32.totalorder %s21, 0
      %p91 = por %p89, %p90
      %p92 = scmp.ne.s32.totalorder %s78, %s79
      %p93 = scmp.eq.s32.totalorder %s22, 106
      %p94 = por %p92, %p93
      %p96 = scmp.ne.s32.totalorder %s79, %s95
      %p97 = scmp.eq.s32.totalorder %s22, 0
      %p98 = por %p96, %p97
      %s99 = ssub.s32 %s24, %s38
      %p100 = scmp.eq.s32.totalorder %s99, 0
      %s102 = sadd.s32 %s101, 1
      %s103 = scalar_select %p100, %s101, %s102
      %p106 = pneg %p100
      %p107 = scmp.eq.s32.totalorder %s16, 106
      %p108 = por %p106, %p107
      %p109 = scmp.ne.s32.totalorder %s101, %s104
      %p110 = scmp.eq.s32.totalorder %s16, 0
      %p111 = por %p109, %p110
      %p112 = scmp.ne.s32.totalorder %s101, %s104
      %p113 = scmp.eq.s32.totalorder %s21, 106
      %p114 = por %p112, %p113
      %p115 = scmp.ne.s32.totalorder %s104, %s105
      %p116 = scmp.eq.s32.totalorder %s21, 0
      %p117 = por %p115, %p116
      %p118 = scmp.ne.s32.totalorder %s104, %s105
      %p119 = scmp.eq.s32.totalorder %s22, 106
      %p120 = por %p118, %p119
      %p122 = scmp.ne.s32.totalorder %s105, %s121
      %p123 = scmp.eq.s32.totalorder %s22, 0
      %p124 = por %p122, %p123
      %s125 = ssub.s32 %s23, %s42
      %s126 = ssub.s32 %s24, %s38
      %s127 = sor.u32 %s125, %s126
      %p128 = scmp.eq.s32.totalorder %s127, 0
      %s130 = sadd.s32 %s129, 1
      %s131 = scalar_select %p128, %s129, %s130
      %p134 = pneg %p128
      %p135 = scmp.eq.s32.totalorder %s16, 106
      %p136 = por %p134, %p135
      %p137 = scmp.ne.s32.totalorder %s129, %s132
      %p138 = scmp.eq.s32.totalorder %s16, 0
      %p139 = por %p137, %p138
      %p140 = scmp.ne.s32.totalorder %s129, %s132
      %p141 = scmp.eq.s32.totalorder %s21, 106
      %p142 = por %p140, %p141
      %p143 = scmp.ne.s32.totalorder %s132, %s133
      %p144 = scmp.eq.s32.totalorder %s21, 0
      %p145 = por %p143, %p144
      %p146 = scmp.ne.s32.totalorder %s132, %s133
      %p147 = scmp.eq.s32.totalorder %s22, 106
      %p148 = por %p146, %p147
      %p150 = scmp.ne.s32.totalorder %s133, %s149
      %p151 = scmp.eq.s32.totalorder %s22, 0
      %p152 = por %p150, %p151
      %p153 = scmp.le.s32.totalorder 1, %s16
      %p154 = scmp.lt.s32.totalorder %s16, 108
      %p155 = pnand %p153, %p154
      %p156 = pneg %p155
      // Predicated region
      $region9: #{tpu_custom_call.1} parent=5 // pred_check
        _
      $region10: #{tpu_custom_call.1} parent=5 // pred_check_branch
        %158 = sbr.rel (%p155) target = $region12
      $region11: #{tpu_custom_call.1} parent=5 // pred_region
        %s159 = ssub.s32 %s16, 1
        // Predicated region
        $region13: #{tpu_custom_call.1} parent=11 // pred_check
          %p160 = pneg %p91
        $region14: #{tpu_custom_call.1} parent=11 // pred_check_branch
          %162 = sbr.rel (%p160) target = $region16
        $region15: #{tpu_custom_call.1} parent=11 // pred_region
          %s163 = smul.u32 16, %s28
          %165 = vsyncadd [#allocation7], 0
          %s166 = sadd.s32 %s27, %s163
          %s167 = smul.addr %s166, 4
          %s168 = scalar_lea.hbm %s1, %s167
          %s169 = sshll.u32 %s168, 4
          %s170 = int_to_ptr.hbm [resolvable:$true] %s169
          %s171 = sshll.u32 [#allocation6], 4
          %s172 = int_to_ptr.vmem [resolvable:$true] %s171
          %177 = dma.hbm_to_vmem [thread:$0]  %s170, 1024, %s172, [#allocation7], 64, 64, 4
        $region16: #{tpu_custom_call.1} parent=11 // pred_fallthru
          _
        // Predicated region
        $region17: #{tpu_custom_call.1} parent=11 // pred_check
          %p178 = pneg %p117
        $region18: #{tpu_custom_call.1} parent=11 // pred_check_branch
          %180 = sbr.rel (%p178) target = $region20
        $region19: #{tpu_custom_call.1} parent=11 // pred_region
          %182 = vsyncadd [#allocation7], 0
          %s183 = scalar_lea.hbm %s2, %s27
          %s185 = sshll.u32 %s183, 4
          %s186 = int_to_ptr.hbm [resolvable:$true] %s185
          %s187 = sshll.u32 [#allocation8], 4
          %s188 = int_to_ptr.vmem [resolvable:$true] %s187
          %190 = dma.hbm_to_vmem [thread:$0]  %s186, 16, %s188, [#allocation7]
        $region20: #{tpu_custom_call.1} parent=11 // pred_fallthru
          _
      $region12: #{tpu_custom_call.1} parent=5 // pred_fallthru
        _
      %p191 = scmp.lt.s32.totalorder %s16, 107
      // Predicated region
      $region21: #{tpu_custom_call.1} parent=5 // pred_check
        %p192 = pneg %p191
      $region22: #{tpu_custom_call.1} parent=5 // pred_check_branch
        %194 = sbr.rel (%p192) target = $region24
      $region23: #{tpu_custom_call.1} parent=5 // pred_region
        // Predicated region
        $region25: #{tpu_custom_call.1} parent=23 // pred_check
          %p195 = pneg %p57
        $region26: #{tpu_custom_call.1} parent=23 // pred_check_branch
          %197 = sbr.rel (%p195) target = $region28
        $region27: #{tpu_custom_call.1} parent=23 // pred_region
          %s198 = sand.u32 %s47, 1
          %s199 = scalar_lea.sflag [#allocation4], %s198
          %s200 = sand.u32 %s47, 1
          %s201 = smul.addr %s200, 428
          %s202 = scalar_lea.vmem [#allocation3], %s201
          %s203 = smul.u32 107, %s23
          %205 = vsyncadd %s199, 0
          %s206 = sadd.s32 %s25, %s203
          %s207 = smul.addr %s206, 4
          %s208 = scalar_lea.hbm %s0, %s207
          %s209 = sshll.u32 %s208, 4
          %s210 = int_to_ptr.hbm [resolvable:$true] %s209
          %s211 = sshll.u32 %s202, 4
          %s212 = int_to_ptr.vmem [resolvable:$true] %s211
          %217 = dma.hbm_to_vmem [thread:$0]  %s210, 6848, %s212, %s199, 64, 64, 4
        $region28: #{tpu_custom_call.1} parent=23 // pred_fallthru
          _
      $region24: #{tpu_custom_call.1} parent=5 // pred_fallthru
        _
      %p218 = scmp.le.s32.totalorder 1, %s16
      %p219 = scmp.lt.s32.totalorder %s16, 108
      %p220 = pnand %p218, %p219
      %p221 = pneg %p220
      // Predicated region
      $region29: #{tpu_custom_call.1} parent=5 // pred_check
        _
      $region30: #{tpu_custom_call.1} parent=5 // pred_check_branch
        %223 = sbr.rel (%p220) target = $region32
      $region31: #{tpu_custom_call.1} parent=5 // pred_region
        %s224 = ssub.s32 %s16, 1
        %s225 = sand.u32 %s50, 1
        %s226 = scalar_lea.sflag [#allocation4], %s225
        %s227 = sand.u32 %s50, 1
        %s228 = smul.addr %s227, 428
        %s229 = scalar_lea.vmem [#allocation3], %s228
        // Predicated region
        $region33: #{tpu_custom_call.1} parent=31 // pred_check
          %p230 = pneg %p63
        $region34: #{tpu_custom_call.1} parent=31 // pred_check_branch
          %232 = sbr.rel (%p230) target = $region36
        $region35: #{tpu_custom_call.1} parent=31 // pred_region
          %234 = dma.done %s226, 6848
        $region36: #{tpu_custom_call.1} parent=31 // pred_fallthru
          _
        // Predicated region
        $region37: #{tpu_custom_call.1} parent=31 // pred_check
          %p235 = pneg %p91
        $region38: #{tpu_custom_call.1} parent=31 // pred_check_branch
          %237 = sbr.rel (%p235) target = $region40
        $region39: #{tpu_custom_call.1} parent=31 // pred_region
          %239 = dma.done [#allocation7], 1024
        $region40: #{tpu_custom_call.1} parent=31 // pred_fallthru
          _
        // Predicated region
        $region41: #{tpu_custom_call.1} parent=31 // pred_check
          %p240 = pneg %p117
        $region42: #{tpu_custom_call.1} parent=31 // pred_check_branch
          %242 = sbr.rel (%p240) target = $region44
        $region43: #{tpu_custom_call.1} parent=31 // pred_region
          %244 = dma.done [#allocation7], 16
        $region44: #{tpu_custom_call.1} parent=31 // pred_fallthru
          _
        %s245 = sand.u32 %s50, 1
        %s246 = scalar_lea.sflag [#allocation4], %s245
        %s247 = sand.u32 %s50, 1
        %s248 = smul.addr %s247, 428
        %s249 = scalar_lea.vmem [#allocation3], %s248
        %p250 = pneg %p63
        %p251 = pneg %p60
        %p252 = pneg %p91
        %p253 = pneg %p88
        %p254 = pneg %p117
        %p255 = pneg %p114
        %p256 = pneg %p145
        %p257 = pneg %p142
        %s258 = sand.u32 %s132, 1
        %s259 = scalar_lea.sflag [#allocation5], %s258
        %s260 = sand.u32 %s132, 1
        %s261 = smul.addr %s260, 428
        %s262 = scalar_lea.vmem [#allocation9], %s261
        %s263 = smul.u32 107, %s26
        %s264 = smul.u32 16, %s28
        %s265 = smul.u32 107, %s26
        %p266 = scmp.eq.s32.totalorder %s28, 0
        // Predicated region
        $region45: #{tpu_custom_call.1} parent=31 // pred_check
          %p267 = pneg %p266
        $region46: #{tpu_custom_call.1} parent=31 // pred_check_branch
          %269 = sbr.rel (%p267) target = $region48
        $region47: #{tpu_custom_call.1} parent=31 // pred_region
          %270 = vst [vmem:[#allocation2] sm:$0xff] 0.0
          %271 = vst [vmem:[#allocation2 + $0x8] sm:$0xff] 0.0
          %272 = vst [vmem:[#allocation2 + $0x10] sm:$0xff] 0.0
          %273 = vst [vmem:[#allocation2 + $0x18] sm:$0xff] 0.0
          %274 = vst [vmem:[#allocation2 + $0x20] sm:$0xff] 0.0
          %275 = vst [vmem:[#allocation2 + $0x28] sm:$0xff] 0.0
          %276 = vst [vmem:[#allocation2 + $0x30] sm:$0xff] 0.0
          %277 = vst [vmem:[#allocation2 + $0x38] sm:$0xff] 0.0
          %278 = vst [vmem:[#allocation2 + $0x40] sm:$0xff] 0.0
          %279 = vst [vmem:[#allocation2 + $0x48] sm:$0xff] 0.0
          %280 = vst [vmem:[#allocation2 + $0x50] sm:$0xff] 0.0
          %281 = vst [vmem:[#allocation2 + $0x58] sm:$0xff] 0.0
          %282 = vst [vmem:[#allocation2 + $0x60] sm:$0xff] 0.0
          %283 = vst [vmem:[#allocation2 + $0x68] sm:$0xff] 0.0
          %284 = vst [vmem:[#allocation2 + $0x70] sm:$0xff] 0.0
          %285 = vst [vmem:[#allocation2 + $0x78] sm:$0xff] 0.0
          %286 = vst [vmem:[#allocation2 + $0x80] sm:$0xff] 0.0
          %287 = vst [vmem:[#allocation2 + $0x88] sm:$0xff] 0.0
          %288 = vst [vmem:[#allocation2 + $0x90] sm:$0xff] 0.0
          %289 = vst [vmem:[#allocation2 + $0x98] sm:$0xff] 0.0
          %290 = vst [vmem:[#allocation2 + $0xa0] sm:$0xff] 0.0
          %291 = vst [vmem:[#allocation2 + $0xa8] sm:$0xff] 0.0
          %292 = vst [vmem:[#allocation2 + $0xb0] sm:$0xff] 0.0
          %293 = vst [vmem:[#allocation2 + $0xb8] sm:$0xff] 0.0
          %294 = vst [vmem:[#allocation2 + $0xc0] sm:$0xff] 0.0
          %295 = vst [vmem:[#allocation2 + $0xc8] sm:$0xff] 0.0
          %296 = vst [vmem:[#allocation2 + $0xd0] sm:$0xff] 0.0
          %297 = vst [vmem:[#allocation2 + $0xd8] sm:$0xff] 0.0
          %298 = vst [vmem:[#allocation2 + $0xe0] sm:$0xff] 0.0
          %299 = vst [vmem:[#allocation2 + $0xe8] sm:$0xff] 0.0
          %300 = vst [vmem:[#allocation2 + $0xf0] sm:$0xff] 0.0
          %301 = vst [vmem:[#allocation2 + $0xf8] sm:$0xff] 0.0
          %302 = vst [vmem:[#allocation2 + $0x100] sm:$0xff] 0.0
          %303 = vst [vmem:[#allocation2 + $0x108] sm:$0xff] 0.0
          %304 = vst [vmem:[#allocation2 + $0x110] sm:$0xff] 0.0
          %305 = vst [vmem:[#allocation2 + $0x118] sm:$0xff] 0.0
          %306 = vst [vmem:[#allocation2 + $0x120] sm:$0xff] 0.0
          %307 = vst [vmem:[#allocation2 + $0x128] sm:$0xff] 0.0
          %308 = vst [vmem:[#allocation2 + $0x130] sm:$0xff] 0.0
          %309 = vst [vmem:[#allocation2 + $0x138] sm:$0xff] 0.0
          %310 = vst [vmem:[#allocation2 + $0x140] sm:$0xff] 0.0
          %311 = vst [vmem:[#allocation2 + $0x148] sm:$0xff] 0.0
          %312 = vst [vmem:[#allocation2 + $0x150] sm:$0xff] 0.0
          %313 = vst [vmem:[#allocation2 + $0x158] sm:$0xff] 0.0
          %314 = vst [vmem:[#allocation2 + $0x160] sm:$0xff] 0.0
          %315 = vst [vmem:[#allocation2 + $0x168] sm:$0xff] 0.0
          %316 = vst [vmem:[#allocation2 + $0x170] sm:$0xff] 0.0
          %317 = vst [vmem:[#allocation2 + $0x178] sm:$0xff] 0.0
          %318 = vst [vmem:[#allocation2 + $0x180] sm:$0xff] 0.0
          %319 = vst [vmem:[#allocation2 + $0x188] sm:$0xff] 0.0
          %320 = vst [vmem:[#allocation2 + $0x190] sm:$0xff] 0.0
          %321 = vst [vmem:[#allocation2 + $0x198] sm:$0xff] 0.0
          %322 = vst [vmem:[#allocation2 + $0x1a0] sm:$0xff] 0.0
          %323 = vst [vmem:[#allocation2 + $0x1a8] sm:$0xff] 0.0
          %324 = vst [vmem:[#allocation2 + $0x1b0] sm:$0xff] 0.0
          %325 = vst [vmem:[#allocation2 + $0x1b8] sm:$0xff] 0.0
          %326 = vst [vmem:[#allocation2 + $0x1c0] sm:$0xff] 0.0
          %327 = vst [vmem:[#allocation2 + $0x1c8] sm:$0xff] 0.0
          %328 = vst [vmem:[#allocation2 + $0x1d0] sm:$0xff] 0.0
          %329 = vst [vmem:[#allocation2 + $0x1d8] sm:$0xff] 0.0
          %330 = vst [vmem:[#allocation2 + $0x1e0] sm:$0xff] 0.0
          %331 = vst [vmem:[#allocation2 + $0x1e8] sm:$0xff] 0.0
          %332 = vst [vmem:[#allocation2 + $0x1f0] sm:$0xff] 0.0
          %333 = vst [vmem:[#allocation2 + $0x1f8] sm:$0xff] 0.0
          %334 = vst [vmem:[#allocation2 + $0x200] sm:$0xff] 0.0
          %335 = vst [vmem:[#allocation2 + $0x208] sm:$0xff] 0.0
          %336 = vst [vmem:[#allocation2 + $0x210] sm:$0xff] 0.0
          %337 = vst [vmem:[#allocation2 + $0x218] sm:$0xff] 0.0
          %338 = vst [vmem:[#allocation2 + $0x220] sm:$0xff] 0.0
          %339 = vst [vmem:[#allocation2 + $0x228] sm:$0xff] 0.0
          %340 = vst [vmem:[#allocation2 + $0x230] sm:$0xff] 0.0
          %341 = vst [vmem:[#allocation2 + $0x238] sm:$0xff] 0.0
          %342 = vst [vmem:[#allocation2 + $0x240] sm:$0xff] 0.0
          %343 = vst [vmem:[#allocation2 + $0x248] sm:$0xff] 0.0
          %344 = vst [vmem:[#allocation2 + $0x250] sm:$0xff] 0.0
          %345 = vst [vmem:[#allocation2 + $0x258] sm:$0xff] 0.0
          %346 = vst [vmem:[#allocation2 + $0x260] sm:$0xff] 0.0
          %347 = vst [vmem:[#allocation2 + $0x268] sm:$0xff] 0.0
          %348 = vst [vmem:[#allocation2 + $0x270] sm:$0xff] 0.0
          %349 = vst [vmem:[#allocation2 + $0x278] sm:$0xff] 0.0
          %350 = vst [vmem:[#allocation2 + $0x280] sm:$0xff] 0.0
          %351 = vst [vmem:[#allocation2 + $0x288] sm:$0xff] 0.0
          %352 = vst [vmem:[#allocation2 + $0x290] sm:$0xff] 0.0
          %353 = vst [vmem:[#allocation2 + $0x298] sm:$0xff] 0.0
          %354 = vst [vmem:[#allocation2 + $0x2a0] sm:$0xff] 0.0
          %355 = vst [vmem:[#allocation2 + $0x2a8] sm:$0xff] 0.0
          %356 = vst [vmem:[#allocation2 + $0x2b0] sm:$0xff] 0.0
          %357 = vst [vmem:[#allocation2 + $0x2b8] sm:$0xff] 0.0
          %358 = vst [vmem:[#allocation2 + $0x2c0] sm:$0xff] 0.0
          %359 = vst [vmem:[#allocation2 + $0x2c8] sm:$0xff] 0.0
          %360 = vst [vmem:[#allocation2 + $0x2d0] sm:$0xff] 0.0
          %361 = vst [vmem:[#allocation2 + $0x2d8] sm:$0xff] 0.0
          %362 = vst [vmem:[#allocation2 + $0x2e0] sm:$0xff] 0.0
          %363 = vst [vmem:[#allocation2 + $0x2e8] sm:$0xff] 0.0
          %364 = vst [vmem:[#allocation2 + $0x2f0] sm:$0xff] 0.0
          %365 = vst [vmem:[#allocation2 + $0x2f8] sm:$0xff] 0.0
          %366 = vst [vmem:[#allocation2 + $0x300] sm:$0xff] 0.0
          %367 = vst [vmem:[#allocation2 + $0x308] sm:$0xff] 0.0
          %368 = vst [vmem:[#allocation2 + $0x310] sm:$0xff] 0.0
          %369 = vst [vmem:[#allocation2 + $0x318] sm:$0xff] 0.0
          %370 = vst [vmem:[#allocation2 + $0x320] sm:$0xff] 0.0
          %371 = vst [vmem:[#allocation2 + $0x328] sm:$0xff] 0.0
          %372 = vst [vmem:[#allocation2 + $0x330] sm:$0xff] 0.0
          %373 = vst [vmem:[#allocation2 + $0x338] sm:$0xff] 0.0
          %374 = vst [vmem:[#allocation2 + $0x340] sm:$0xff] 0.0
          %375 = vst [vmem:[#allocation2 + $0x348] sm:$0xff] 0.0
          %376 = vst [vmem:[#allocation2 + $0x350] sm:$0xff] 0.0
        $region48: #{tpu_custom_call.1} parent=31 // pred_fallthru
          _
        %v377 = vld [vmem:[#allocation2] sm:$0xff]
        %v378 = vld [vmem:[#allocation2 + $0x8] sm:$0xff]
        %v379 = vld [vmem:[#allocation2 + $0x10] sm:$0xff]
        %v380 = vld [vmem:[#allocation2 + $0x18] sm:$0xff]
        %v381 = vld [vmem:[#allocation2 + $0x20] sm:$0xff]
        %v382 = vld [vmem:[#allocation2 + $0x28] sm:$0xff]
        %v383 = vld [vmem:[#allocation2 + $0x30] sm:$0xff]
        %v384 = vld [vmem:[#allocation2 + $0x38] sm:$0xff]
        %v385 = vld [vmem:[#allocation2 + $0x40] sm:$0xff]
        %v386 = vld [vmem:[#allocation2 + $0x48] sm:$0xff]
        %v387 = vld [vmem:[#allocation2 + $0x50] sm:$0xff]
        %v388 = vld [vmem:[#allocation2 + $0x58] sm:$0xff]
        %v389 = vld [vmem:[#allocation2 + $0x60] sm:$0xff]
        %v390 = vld [vmem:[#allocation2 + $0x68] sm:$0xff]
        %v391 = vld [vmem:[#allocation2 + $0x70] sm:$0xff]
        %v392 = vld [vmem:[#allocation2 + $0x78] sm:$0xff]
        %v393 = vld [vmem:[#allocation2 + $0x80] sm:$0xff]
        %v394 = vld [vmem:[#allocation2 + $0x88] sm:$0xff]
        %v395 = vld [vmem:[#allocation2 + $0x90] sm:$0xff]
        %v396 = vld [vmem:[#allocation2 + $0x98] sm:$0xff]
        %v397 = vld [vmem:[#allocation2 + $0xa0] sm:$0xff]
        %v398 = vld [vmem:[#allocation2 + $0xa8] sm:$0xff]
        %v399 = vld [vmem:[#allocation2 + $0xb0] sm:$0xff]
        %v400 = vld [vmem:[#allocation2 + $0xb8] sm:$0xff]
        %v401 = vld [vmem:[#allocation2 + $0xc0] sm:$0xff]
        %v402 = vld [vmem:[#allocation2 + $0xc8] sm:$0xff]
        %v403 = vld [vmem:[#allocation2 + $0xd0] sm:$0xff]
        %v404 = vld [vmem:[#allocation2 + $0xd8] sm:$0xff]
        %v405 = vld [vmem:[#allocation2 + $0xe0] sm:$0xff]
        %v406 = vld [vmem:[#allocation2 + $0xe8] sm:$0xff]
        %v407 = vld [vmem:[#allocation2 + $0xf0] sm:$0xff]
        %v408 = vld [vmem:[#allocation2 + $0xf8] sm:$0xff]
        %v409 = vld [vmem:[#allocation2 + $0x100] sm:$0xff]
        %v410 = vld [vmem:[#allocation2 + $0x108] sm:$0xff]
        %v411 = vld [vmem:[#allocation2 + $0x110] sm:$0xff]
        %v412 = vld [vmem:[#allocation2 + $0x118] sm:$0xff]
        %v413 = vld [vmem:[#allocation2 + $0x120] sm:$0xff]
        %v414 = vld [vmem:[#allocation2 + $0x128] sm:$0xff]
        %v415 = vld [vmem:[#allocation2 + $0x130] sm:$0xff]
        %v416 = vld [vmem:[#allocation2 + $0x138] sm:$0xff]
        %v417 = vld [vmem:[#allocation2 + $0x140] sm:$0xff]
        %v418 = vld [vmem:[#allocation2 + $0x148] sm:$0xff]
        %v419 = vld [vmem:[#allocation2 + $0x150] sm:$0xff]
        %v420 = vld [vmem:[#allocation2 + $0x158] sm:$0xff]
        %v421 = vld [vmem:[#allocation2 + $0x160] sm:$0xff]
        %v422 = vld [vmem:[#allocation2 + $0x168] sm:$0xff]
        %v423 = vld [vmem:[#allocation2 + $0x170] sm:$0xff]
        %v424 = vld [vmem:[#allocation2 + $0x178] sm:$0xff]
        %v425 = vld [vmem:[#allocation2 + $0x180] sm:$0xff]
        %v426 = vld [vmem:[#allocation2 + $0x188] sm:$0xff]
        %v427 = vld [vmem:[#allocation2 + $0x190] sm:$0xff]
        %v428 = vld [vmem:[#allocation2 + $0x198] sm:$0xff]
        %v429 = vld [vmem:[#allocation2 + $0x1a0] sm:$0xff]
        %v430 = vld [vmem:[#allocation2 + $0x1a8] sm:$0xff]
        %v431 = vld [vmem:[#allocation2 + $0x1b0] sm:$0xff]
        %v432 = vld [vmem:[#allocation2 + $0x1b8] sm:$0xff]
        %v433 = vld [vmem:[#allocation2 + $0x1c0] sm:$0xff]
        %v434 = vld [vmem:[#allocation2 + $0x1c8] sm:$0xff]
        %v435 = vld [vmem:[#allocation2 + $0x1d0] sm:$0xff]
        %v436 = vld [vmem:[#allocation2 + $0x1d8] sm:$0xff]
        %v437 = vld [vmem:[#allocation2 + $0x1e0] sm:$0xff]
        %v438 = vld [vmem:[#allocation2 + $0x1e8] sm:$0xff]
        %v439 = vld [vmem:[#allocation2 + $0x1f0] sm:$0xff]
        %v440 = vld [vmem:[#allocation2 + $0x1f8] sm:$0xff]
        %v441 = vld [vmem:[#allocation2 + $0x200] sm:$0xff]
        %v442 = vld [vmem:[#allocation2 + $0x208] sm:$0xff]
        %v443 = vld [vmem:[#allocation2 + $0x210] sm:$0xff]
        %v444 = vld [vmem:[#allocation2 + $0x218] sm:$0xff]
        %v445 = vld [vmem:[#allocation2 + $0x220] sm:$0xff]
        %v446 = vld [vmem:[#allocation2 + $0x228] sm:$0xff]
        %v447 = vld [vmem:[#allocation2 + $0x230] sm:$0xff]
        %v448 = vld [vmem:[#allocation2 + $0x238] sm:$0xff]
        %v449 = vld [vmem:[#allocation2 + $0x240] sm:$0xff]
        %v450 = vld [vmem:[#allocation2 + $0x248] sm:$0xff]
        %v451 = vld [vmem:[#allocation2 + $0x250] sm:$0xff]
        %v452 = vld [vmem:[#allocation2 + $0x258] sm:$0xff]
        %v453 = vld [vmem:[#allocation2 + $0x260] sm:$0xff]
        %v454 = vld [vmem:[#allocation2 + $0x268] sm:$0xff]
        %v455 = vld [vmem:[#allocation2 + $0x270] sm:$0xff]
        %v456 = vld [vmem:[#allocation2 + $0x278] sm:$0xff]
        %v457 = vld [vmem:[#allocation2 + $0x280] sm:$0xff]
        %v458 = vld [vmem:[#allocation2 + $0x288] sm:$0xff]
        %v459 = vld [vmem:[#allocation2 + $0x290] sm:$0xff]
        %v460 = vld [vmem:[#allocation2 + $0x298] sm:$0xff]
        %v461 = vld [vmem:[#allocation2 + $0x2a0] sm:$0xff]
        %v462 = vld [vmem:[#allocation2 + $0x2a8] sm:$0xff]
        %v463 = vld [vmem:[#allocation2 + $0x2b0] sm:$0xff]
        %v464 = vld [vmem:[#allocation2 + $0x2b8] sm:$0xff]
        %v465 = vld [vmem:[#allocation2 + $0x2c0] sm:$0xff]
        %v466 = vld [vmem:[#allocation2 + $0x2c8] sm:$0xff]
        %v467 = vld [vmem:[#allocation2 + $0x2d0] sm:$0xff]
        %v468 = vld [vmem:[#allocation2 + $0x2d8] sm:$0xff]
        %v469 = vld [vmem:[#allocation2 + $0x2e0] sm:$0xff]
        %v470 = vld [vmem:[#allocation2 + $0x2e8] sm:$0xff]
        %v471 = vld [vmem:[#allocation2 + $0x2f0] sm:$0xff]
        %v472 = vld [vmem:[#allocation2 + $0x2f8] sm:$0xff]
        %v473 = vld [vmem:[#allocation2 + $0x300] sm:$0xff]
        %v474 = vld [vmem:[#allocation2 + $0x308] sm:$0xff]
        %v475 = vld [vmem:[#allocation2 + $0x310] sm:$0xff]
        %v476 = vld [vmem:[#allocation2 + $0x318] sm:$0xff]
        %v477 = vld [vmem:[#allocation2 + $0x320] sm:$0xff]
        %v478 = vld [vmem:[#allocation2 + $0x328] sm:$0xff]
        %v479 = vld [vmem:[#allocation2 + $0x330] sm:$0xff]
        %v480 = vld [vmem:[#allocation2 + $0x338] sm:$0xff]
        %v481 = vld [vmem:[#allocation2 + $0x340] sm:$0xff]
        %v482 = vld [vmem:[#allocation2 + $0x348] sm:$0xff]
        %v483 = vld [vmem:[#allocation2 + $0x350] sm:$0xff]
        %v484 = vld [vmem:[%s229] sm:$0xf]
        %v485 = vld [vmem:[%s229 + $0x4] sm:$0xf]
        %v486 = vld [vmem:[%s229 + $0x8] sm:$0xf]
        %v487 = vld [vmem:[%s229 + $0xc] sm:$0xf]
        %v488 = vld [vmem:[%s229 + $0x10] sm:$0xf]
        %v489 = vld [vmem:[%s229 + $0x14] sm:$0xf]
        %v490 = vld [vmem:[%s229 + $0x18] sm:$0xf]
        %v491 = vld [vmem:[%s229 + $0x1c] sm:$0xf]
        %v492 = vld [vmem:[%s229 + $0x20] sm:$0xf]
        %v493 = vld [vmem:[%s229 + $0x24] sm:$0xf]
        %v494 = vld [vmem:[%s229 + $0x28] sm:$0xf]
        %v495 = vld [vmem:[%s229 + $0x2c] sm:$0xf]
        %v496 = vld [vmem:[%s229 + $0x30] sm:$0xf]
        %v497 = vld [vmem:[%s229 + $0x34] sm:$0xf]
        %v498 = vld [vmem:[%s229 + $0x38] sm:$0xf]
        %v499 = vld [vmem:[%s229 + $0x3c] sm:$0xf]
        %v500 = vld [vmem:[%s229 + $0x40] sm:$0xf]
        %v501 = vld [vmem:[%s229 + $0x44] sm:$0xf]
        %v502 = vld [vmem:[%s229 + $0x48] sm:$0xf]
        %v503 = vld [vmem:[%s229 + $0x4c] sm:$0xf]
        %v504 = vld [vmem:[%s229 + $0x50] sm:$0xf]
        %v505 = vld [vmem:[%s229 + $0x54] sm:$0xf]
        %v506 = vld [vmem:[%s229 + $0x58] sm:$0xf]
        %v507 = vld [vmem:[%s229 + $0x5c] sm:$0xf]
        %v508 = vld [vmem:[%s229 + $0x60] sm:$0xf]
        %v509 = vld [vmem:[%s229 + $0x64] sm:$0xf]
        %v510 = vld [vmem:[%s229 + $0x68] sm:$0xf]
        %v511 = vld [vmem:[%s229 + $0x6c] sm:$0xf]
        %v512 = vld [vmem:[%s229 + $0x70] sm:$0xf]
        %v513 = vld [vmem:[%s229 + $0x74] sm:$0xf]
        %v514 = vld [vmem:[%s229 + $0x78] sm:$0xf]
        %v515 = vld [vmem:[%s229 + $0x7c] sm:$0xf]
        %v516 = vld [vmem:[%s229 + $0x80] sm:$0xf]
        %v517 = vld [vmem:[%s229 + $0x84] sm:$0xf]
        %v518 = vld [vmem:[%s229 + $0x88] sm:$0xf]
        %v519 = vld [vmem:[%s229 + $0x8c] sm:$0xf]
        %v520 = vld [vmem:[%s229 + $0x90] sm:$0xf]
        %v521 = vld [vmem:[%s229 + $0x94] sm:$0xf]
        %v522 = vld [vmem:[%s229 + $0x98] sm:$0xf]
        %v523 = vld [vmem:[%s229 + $0x9c] sm:$0xf]
        %v524 = vld [vmem:[%s229 + $0xa0] sm:$0xf]
        %v525 = vld [vmem:[%s229 + $0xa4] sm:$0xf]
        %v526 = vld [vmem:[%s229 + $0xa8] sm:$0xf]
        %v527 = vld [vmem:[%s229 + $0xac] sm:$0xf]
        %v528 = vld [vmem:[%s229 + $0xb0] sm:$0xf]
        %v529 = vld [vmem:[%s229 + $0xb4] sm:$0xf]
        %v530 = vld [vmem:[%s229 + $0xb8] sm:$0xf]
        %v531 = vld [vmem:[%s229 + $0xbc] sm:$0xf]
        %v532 = vld [vmem:[%s229 + $0xc0] sm:$0xf]
        %v533 = vld [vmem:[%s229 + $0xc4] sm:$0xf]
        %v534 = vld [vmem:[%s229 + $0xc8] sm:$0xf]
        %v535 = vld [vmem:[%s229 + $0xcc] sm:$0xf]
        %v536 = vld [vmem:[%s229 + $0xd0] sm:$0xf]
        %v537 = vld [vmem:[%s229 + $0xd4] sm:$0xf]
        %v538 = vld [vmem:[%s229 + $0xd8] sm:$0xf]
        %v539 = vld [vmem:[%s229 + $0xdc] sm:$0xf]
        %v540 = vld [vmem:[%s229 + $0xe0] sm:$0xf]
        %v541 = vld [vmem:[%s229 + $0xe4] sm:$0xf]
        %v542 = vld [vmem:[%s229 + $0xe8] sm:$0xf]
        %v543 = vld [vmem:[%s229 + $0xec] sm:$0xf]
        %v544 = vld [vmem:[%s229 + $0xf0] sm:$0xf]
        %v545 = vld [vmem:[%s229 + $0xf4] sm:$0xf]
        %v546 = vld [vmem:[%s229 + $0xf8] sm:$0xf]
        %v547 = vld [vmem:[%s229 + $0xfc] sm:$0xf]
        %v548 = vld [vmem:[%s229 + $0x100] sm:$0xf]
        %v549 = vld [vmem:[%s229 + $0x104] sm:$0xf]
        %v550 = vld [vmem:[%s229 + $0x108] sm:$0xf]
        %v551 = vld [vmem:[%s229 + $0x10c] sm:$0xf]
        %v552 = vld [vmem:[%s229 + $0x110] sm:$0xf]
        %v553 = vld [vmem:[%s229 + $0x114] sm:$0xf]
        %v554 = vld [vmem:[%s229 + $0x118] sm:$0xf]
        %v555 = vld [vmem:[%s229 + $0x11c] sm:$0xf]
        %v556 = vld [vmem:[%s229 + $0x120] sm:$0xf]
        %v557 = vld [vmem:[%s229 + $0x124] sm:$0xf]
        %v558 = vld [vmem:[%s229 + $0x128] sm:$0xf]
        %v559 = vld [vmem:[%s229 + $0x12c] sm:$0xf]
        %v560 = vld [vmem:[%s229 + $0x130] sm:$0xf]
        %v561 = vld [vmem:[%s229 + $0x134] sm:$0xf]
        %v562 = vld [vmem:[%s229 + $0x138] sm:$0xf]
        %v563 = vld [vmem:[%s229 + $0x13c] sm:$0xf]
        %v564 = vld [vmem:[%s229 + $0x140] sm:$0xf]
        %v565 = vld [vmem:[%s229 + $0x144] sm:$0xf]
        %v566 = vld [vmem:[%s229 + $0x148] sm:$0xf]
        %v567 = vld [vmem:[%s229 + $0x14c] sm:$0xf]
        %v568 = vld [vmem:[%s229 + $0x150] sm:$0xf]
        %v569 = vld [vmem:[%s229 + $0x154] sm:$0xf]
        %v570 = vld [vmem:[%s229 + $0x158] sm:$0xf]
        %v571 = vld [vmem:[%s229 + $0x15c] sm:$0xf]
        %v572 = vld [vmem:[%s229 + $0x160] sm:$0xf]
        %v573 = vld [vmem:[%s229 + $0x164] sm:$0xf]
        %v574 = vld [vmem:[%s229 + $0x168] sm:$0xf]
        %v575 = vld [vmem:[%s229 + $0x16c] sm:$0xf]
        %v576 = vld [vmem:[%s229 + $0x170] sm:$0xf]
        %v577 = vld [vmem:[%s229 + $0x174] sm:$0xf]
        %v578 = vld [vmem:[%s229 + $0x178] sm:$0xf]
        %v579 = vld [vmem:[%s229 + $0x17c] sm:$0xf]
        %v580 = vld [vmem:[%s229 + $0x180] sm:$0xf]
        %v581 = vld [vmem:[%s229 + $0x184] sm:$0xf]
        %v582 = vld [vmem:[%s229 + $0x188] sm:$0xf]
        %v583 = vld [vmem:[%s229 + $0x18c] sm:$0xf]
        %v584 = vld [vmem:[%s229 + $0x190] sm:$0xf]
        %v585 = vld [vmem:[%s229 + $0x194] sm:$0xf]
        %v586 = vld [vmem:[%s229 + $0x198] sm:$0xf]
        %v587 = vld [vmem:[%s229 + $0x19c] sm:$0xf]
        %v588 = vld [vmem:[%s229 + $0x1a0] sm:$0xf]
        %v589 = vld [vmem:[%s229 + $0x1a4] sm:$0xf]
        %v590 = vld [vmem:[%s229 + $0x1a8] sm:$0xf]
        %v591 = vld [vmem:[#allocation6] sm:$0xf]
        %v592 = vld [vmem:[#allocation6 + $0x4] sm:$0xf]
        %v593 = vld [vmem:[#allocation6 + $0x8] sm:$0xf]
        %v594 = vld [vmem:[#allocation6 + $0xc] sm:$0xf]
        %v595 = vld [vmem:[#allocation6 + $0x10] sm:$0xf]
        %v596 = vld [vmem:[#allocation6 + $0x14] sm:$0xf]
        %v597 = vld [vmem:[#allocation6 + $0x18] sm:$0xf]
        %v598 = vld [vmem:[#allocation6 + $0x1c] sm:$0xf]
        %v599 = vld [vmem:[#allocation6 + $0x20] sm:$0xf]
        %v600 = vld [vmem:[#allocation6 + $0x24] sm:$0xf]
        %v601 = vld [vmem:[#allocation6 + $0x28] sm:$0xf]
        %v602 = vld [vmem:[#allocation6 + $0x2c] sm:$0xf]
        %v603 = vld [vmem:[#allocation6 + $0x30] sm:$0xf]
        %v604 = vld [vmem:[#allocation6 + $0x34] sm:$0xf]
        %v605 = vld [vmem:[#allocation6 + $0x38] sm:$0xf]
        %v606 = vld [vmem:[#allocation6 + $0x3c] sm:$0xf]
        %v714 = vunpack.c.l.b16 %v484
        %v715 = vunpack.c.l.b16 %v485
        %v716 = vunpack.c.l.b16 %v486
        %v717 = vunpack.c.l.b16 %v487
        %v718 = vunpack.c.l.b16 %v488
        %v719 = vunpack.c.l.b16 %v489
        %v720 = vunpack.c.l.b16 %v490
        %v721 = vunpack.c.l.b16 %v491
        %v722 = vunpack.c.l.b16 %v492
        %v723 = vunpack.c.l.b16 %v493
        %v724 = vunpack.c.l.b16 %v494
        %v725 = vunpack.c.l.b16 %v495
        %v726 = vunpack.c.l.b16 %v496
        %v727 = vunpack.c.l.b16 %v497
        %v728 = vunpack.c.l.b16 %v498
        %v729 = vunpack.c.l.b16 %v499
        %v730 = vunpack.c.l.b16 %v500
        %v731 = vunpack.c.l.b16 %v501
        %v732 = vunpack.c.l.b16 %v502
        %v733 = vunpack.c.l.b16 %v503
        %v734 = vunpack.c.l.b16 %v504
        %v735 = vunpack.c.l.b16 %v505
        %v736 = vunpack.c.l.b16 %v506
        %v737 = vunpack.c.l.b16 %v507
        %v738 = vunpack.c.l.b16 %v508
        %v739 = vunpack.c.l.b16 %v509
        %v740 = vunpack.c.l.b16 %v510
        %v741 = vunpack.c.l.b16 %v511
        %v742 = vunpack.c.l.b16 %v512
        %v743 = vunpack.c.l.b16 %v513
        %v744 = vunpack.c.l.b16 %v514
        %v745 = vunpack.c.l.b16 %v515
        %v746 = vunpack.c.l.b16 %v516
        %v747 = vunpack.c.l.b16 %v517
        %v748 = vunpack.c.l.b16 %v518
        %v749 = vunpack.c.l.b16 %v519
        %v750 = vunpack.c.l.b16 %v520
        %v751 = vunpack.c.l.b16 %v521
        %v752 = vunpack.c.l.b16 %v522
        %v753 = vunpack.c.l.b16 %v523
        %v754 = vunpack.c.l.b16 %v524
        %v755 = vunpack.c.l.b16 %v525
        %v756 = vunpack.c.l.b16 %v526
        %v757 = vunpack.c.l.b16 %v527
        %v758 = vunpack.c.l.b16 %v528
        %v759 = vunpack.c.l.b16 %v529
        %v760 = vunpack.c.l.b16 %v530
        %v761 = vunpack.c.l.b16 %v531
        %v762 = vunpack.c.l.b16 %v532
        %v763 = vunpack.c.l.b16 %v533
        %v764 = vunpack.c.l.b16 %v534
        %v765 = vunpack.c.l.b16 %v535
        %v766 = vunpack.c.l.b16 %v536
        %v767 = vunpack.c.l.b16 %v537
        %v768 = vunpack.c.l.b16 %v538
        %v769 = vunpack.c.l.b16 %v539
        %v770 = vunpack.c.l.b16 %v540
        %v771 = vunpack.c.l.b16 %v541
        %v772 = vunpack.c.l.b16 %v542
        %v773 = vunpack.c.l.b16 %v543
        %v774 = vunpack.c.l.b16 %v544
        %v775 = vunpack.c.l.b16 %v545
        %v776 = vunpack.c.l.b16 %v546
        %v777 = vunpack.c.l.b16 %v547
        %v778 = vunpack.c.l.b16 %v548
        %v779 = vunpack.c.l.b16 %v549
        %v780 = vunpack.c.l.b16 %v550
        %v781 = vunpack.c.l.b16 %v551
        %v782 = vunpack.c.l.b16 %v552
        %v783 = vunpack.c.l.b16 %v553
        %v784 = vunpack.c.l.b16 %v554
        %v785 = vunpack.c.l.b16 %v555
        %v786 = vunpack.c.l.b16 %v556
        %v787 = vunpack.c.l.b16 %v557
        %v788 = vunpack.c.l.b16 %v558
        %v789 = vunpack.c.l.b16 %v559
        %v790 = vunpack.c.l.b16 %v560
        %v791 = vunpack.c.l.b16 %v561
        %v792 = vunpack.c.l.b16 %v562
        %v793 = vunpack.c.l.b16 %v563
        %v794 = vunpack.c.l.b16 %v564
        %v795 = vunpack.c.l.b16 %v565
        %v796 = vunpack.c.l.b16 %v566
        %v797 = vunpack.c.l.b16 %v567
        %v798 = vunpack.c.l.b16 %v568
        %v799 = vunpack.c.l.b16 %v569
        %v800 = vunpack.c.l.b16 %v570
        %v801 = vunpack.c.l.b16 %v571
        %v802 = vunpack.c.l.b16 %v572
        %v803 = vunpack.c.l.b16 %v573
        %v804 = vunpack.c.l.b16 %v574
        %v805 = vunpack.c.l.b16 %v575
        %v806 = vunpack.c.l.b16 %v576
        %v807 = vunpack.c.l.b16 %v577
        %v808 = vunpack.c.l.b16 %v578
        %v809 = vunpack.c.l.b16 %v579
        %v810 = vunpack.c.l.b16 %v580
        %v811 = vunpack.c.l.b16 %v581
        %v812 = vunpack.c.l.b16 %v582
        %v813 = vunpack.c.l.b16 %v583
        %v814 = vunpack.c.l.b16 %v584
        %v815 = vunpack.c.l.b16 %v585
        %v816 = vunpack.c.l.b16 %v586
        %v817 = vunpack.c.l.b16 %v587
        %v818 = vunpack.c.l.b16 %v588
        %v819 = vunpack.c.l.b16 %v589
        %v820 = vunpack.c.l.b16 %v590
        %v821 = vpack.c.b16 %v715, %v714
        %v822 = vpack.c.b16 %v717, %v716
        %v823 = vpack.c.b16 %v719, %v718
        %v824 = vpack.c.b16 %v721, %v720
        %v825 = vpack.c.b16 %v723, %v722
        %v826 = vpack.c.b16 %v725, %v724
        %v827 = vpack.c.b16 %v727, %v726
        %v828 = vpack.c.b16 %v729, %v728
        %v829 = vpack.c.b16 %v731, %v730
        %v830 = vpack.c.b16 %v733, %v732
        %v831 = vpack.c.b16 %v735, %v734
        %v832 = vpack.c.b16 %v737, %v736
        %v833 = vpack.c.b16 %v739, %v738
        %v834 = vpack.c.b16 %v741, %v740
        %v835 = vpack.c.b16 %v743, %v742
        %v836 = vpack.c.b16 %v745, %v744
        %v837 = vpack.c.b16 %v747, %v746
        %v838 = vpack.c.b16 %v749, %v748
        %v839 = vpack.c.b16 %v751, %v750
        %v840 = vpack.c.b16 %v753, %v752
        %v841 = vpack.c.b16 %v755, %v754
        %v842 = vpack.c.b16 %v757, %v756
        %v843 = vpack.c.b16 %v759, %v758
        %v844 = vpack.c.b16 %v761, %v760
        %v845 = vpack.c.b16 %v763, %v762
        %v846 = vpack.c.b16 %v765, %v764
        %v847 = vpack.c.b16 %v767, %v766
        %v848 = vpack.c.b16 %v769, %v768
        %v849 = vpack.c.b16 %v771, %v770
        %v850 = vpack.c.b16 %v773, %v772
        %v851 = vpack.c.b16 %v775, %v774
        %v852 = vpack.c.b16 %v777, %v776
        %v853 = vpack.c.b16 %v779, %v778
        %v854 = vpack.c.b16 %v781, %v780
        %v855 = vpack.c.b16 %v783, %v782
        %v856 = vpack.c.b16 %v785, %v784
        %v857 = vpack.c.b16 %v787, %v786
        %v858 = vpack.c.b16 %v789, %v788
        %v859 = vpack.c.b16 %v791, %v790
        %v860 = vpack.c.b16 %v793, %v792
        %v861 = vpack.c.b16 %v795, %v794
        %v862 = vpack.c.b16 %v797, %v796
        %v863 = vpack.c.b16 %v799, %v798
        %v864 = vpack.c.b16 %v801, %v800
        %v865 = vpack.c.b16 %v803, %v802
        %v866 = vpack.c.b16 %v805, %v804
        %v867 = vpack.c.b16 %v807, %v806
        %v868 = vpack.c.b16 %v809, %v808
        %v869 = vpack.c.b16 %v811, %v810
        %v870 = vpack.c.b16 %v813, %v812
        %v871 = vpack.c.b16 %v815, %v814
        %v872 = vpack.c.b16 %v817, %v816
        %v873 = vpack.c.b16 %v819, %v818
        %v874 = vpack.c.b16 %v820, %v820
        %v945 = vunpack.c.l.b16 %v591
        %v946 = vunpack.c.l.b16 %v592
        %v947 = vunpack.c.l.b16 %v593
        %v948 = vunpack.c.l.b16 %v594
        %v949 = vunpack.c.l.b16 %v595
        %v950 = vunpack.c.l.b16 %v596
        %v951 = vunpack.c.l.b16 %v597
        %v952 = vunpack.c.l.b16 %v598
        %v953 = vunpack.c.l.b16 %v599
        %v954 = vunpack.c.l.b16 %v600
        %v955 = vunpack.c.l.b16 %v601
        %v956 = vunpack.c.l.b16 %v602
        %v957 = vunpack.c.l.b16 %v603
        %v958 = vunpack.c.l.b16 %v604
        %v959 = vunpack.c.l.b16 %v605
        %v960 = vunpack.c.l.b16 %v606
        %v961 = vpack.c.b16 %v946, %v945
        %v962 = vpack.c.b16 %v948, %v947
        %v963 = vpack.c.b16 %v950, %v949
        %v964 = vpack.c.b16 %v952, %v951
        %v965 = vpack.c.b16 %v954, %v953
        %v966 = vpack.c.b16 %v956, %v955
        %v967 = vpack.c.b16 %v958, %v957
        %v968 = vpack.c.b16 %v960, %v959
        %977 = vmatpush.bf16.msra.mxu0 %v968
        %978 = vmatpush.bf16.msra.mxu0 %v967
        %979 = vmatpush.bf16.msra.mxu0 %v966
        %980 = vmatpush.bf16.msra.mxu0 %v965
        %981 = vmatpush.bf16.msra.mxu0 %v964
        %982 = vmatpush.bf16.msra.mxu0 %v963
        %983 = vmatpush.bf16.msra.mxu0 %v962
        %984 = vmatpush.bf16.msra.mxu0 %v961
        %985 = vmatmul.bf16.gmra.mxu0 %v821
        %v986 = vpop.f32.mrf.mxu0
        %v987 = vadd.f32 0.0, %v986
        %v988 = vpop.f32.mrf.mxu0
        %v989 = vadd.f32 0.0, %v988
        %990 = vmatmul.bf16.gmra.mxu0 %v822
        %v991 = vpop.f32.mrf.mxu0
        %v992 = vadd.f32 0.0, %v991
        %v993 = vpop.f32.mrf.mxu0
        %v994 = vadd.f32 0.0, %v993
        %995 = vmatmul.bf16.gmra.mxu0 %v823
        %v996 = vpop.f32.mrf.mxu0
        %v997 = vadd.f32 0.0, %v996
        %v998 = vpop.f32.mrf.mxu0
        %v999 = vadd.f32 0.0, %v998
        %1000 = vmatmul.bf16.gmra.mxu0 %v824
        %v1001 = vpop.f32.mrf.mxu0
        %v1002 = vadd.f32 0.0, %v1001
        %v1003 = vpop.f32.mrf.mxu0
        %v1004 = vadd.f32 0.0, %v1003
        %1005 = vmatmul.bf16.gmra.mxu0 %v825
        %v1006 = vpop.f32.mrf.mxu0
        %v1007 = vadd.f32 0.0, %v1006
        %v1008 = vpop.f32.mrf.mxu0
        %v1009 = vadd.f32 0.0, %v1008
        %1010 = vmatmul.bf16.gmra.mxu0 %v826
        %v1011 = vpop.f32.mrf.mxu0
        %v1012 = vadd.f32 0.0, %v1011
        %v1013 = vpop.f32.mrf.mxu0
        %v1014 = vadd.f32 0.0, %v1013
        %1015 = vmatmul.bf16.gmra.mxu0 %v827
        %v1016 = vpop.f32.mrf.mxu0
        %v1017 = vadd.f32 0.0, %v1016
        %v1018 = vpop.f32.mrf.mxu0
        %v1019 = vadd.f32 0.0, %v1018
        %1020 = vmatmul.bf16.gmra.mxu0 %v828
        %v1021 = vpop.f32.mrf.mxu0
        %v1022 = vadd.f32 0.0, %v1021
        %v1023 = vpop.f32.mrf.mxu0
        %v1024 = vadd.f32 0.0, %v1023
        %1025 = vmatmul.bf16.gmra.mxu0 %v829
        %v1026 = vpop.f32.mrf.mxu0
        %v1027 = vadd.f32 0.0, %v1026
        %v1028 = vpop.f32.mrf.mxu0
        %v1029 = vadd.f32 0.0, %v1028
        %1030 = vmatmul.bf16.gmra.mxu0 %v830
        %v1031 = vpop.f32.mrf.mxu0
        %v1032 = vadd.f32 0.0, %v1031
        %v1033 = vpop.f32.mrf.mxu0
        %v1034 = vadd.f32 0.0, %v1033
        %1035 = vmatmul.bf16.gmra.mxu0 %v831
        %v1036 = vpop.f32.mrf.mxu0
        %v1037 = vadd.f32 0.0, %v1036
        %v1038 = vpop.f32.mrf.mxu0
        %v1039 = vadd.f32 0.0, %v1038
        %1040 = vmatmul.bf16.gmra.mxu0 %v832
        %v1041 = vpop.f32.mrf.mxu0
        %v1042 = vadd.f32 0.0, %v1041
        %v1043 = vpop.f32.mrf.mxu0
        %v1044 = vadd.f32 0.0, %v1043
        %1045 = vmatmul.bf16.gmra.mxu0 %v833
        %v1046 = vpop.f32.mrf.mxu0
        %v1047 = vadd.f32 0.0, %v1046
        %v1048 = vpop.f32.mrf.mxu0
        %v1049 = vadd.f32 0.0, %v1048
        %1050 = vmatmul.bf16.gmra.mxu0 %v834
        %v1051 = vpop.f32.mrf.mxu0
        %v1052 = vadd.f32 0.0, %v1051
        %v1053 = vpop.f32.mrf.mxu0
        %v1054 = vadd.f32 0.0, %v1053
        %1055 = vmatmul.bf16.gmra.mxu0 %v835
        %v1056 = vpop.f32.mrf.mxu0
        %v1057 = vadd.f32 0.0, %v1056
        %v1058 = vpop.f32.mrf.mxu0
        %v1059 = vadd.f32 0.0, %v1058
        %1060 = vmatmul.bf16.gmra.mxu0 %v836
        %v1061 = vpop.f32.mrf.mxu0
        %v1062 = vadd.f32 0.0, %v1061
        %v1063 = vpop.f32.mrf.mxu0
        %v1064 = vadd.f32 0.0, %v1063
        %1065 = vmatmul.bf16.gmra.mxu0 %v837
        %v1066 = vpop.f32.mrf.mxu0
        %v1067 = vadd.f32 0.0, %v1066
        %v1068 = vpop.f32.mrf.mxu0
        %v1069 = vadd.f32 0.0, %v1068
        %1070 = vmatmul.bf16.gmra.mxu0 %v838
        %v1071 = vpop.f32.mrf.mxu0
        %v1072 = vadd.f32 0.0, %v1071
        %v1073 = vpop.f32.mrf.mxu0
        %v1074 = vadd.f32 0.0, %v1073
        %1075 = vmatmul.bf16.gmra.mxu0 %v839
        %v1076 = vpop.f32.mrf.mxu0
        %v1077 = vadd.f32 0.0, %v1076
        %v1078 = vpop.f32.mrf.mxu0
        %v1079 = vadd.f32 0.0, %v1078
        %1080 = vmatmul.bf16.gmra.mxu0 %v840
        %v1081 = vpop.f32.mrf.mxu0
        %v1082 = vadd.f32 0.0, %v1081
        %v1083 = vpop.f32.mrf.mxu0
        %v1084 = vadd.f32 0.0, %v1083
        %1085 = vmatmul.bf16.gmra.mxu0 %v841
        %v1086 = vpop.f32.mrf.mxu0
        %v1087 = vadd.f32 0.0, %v1086
        %v1088 = vpop.f32.mrf.mxu0
        %v1089 = vadd.f32 0.0, %v1088
        %1090 = vmatmul.bf16.gmra.mxu0 %v842
        %v1091 = vpop.f32.mrf.mxu0
        %v1092 = vadd.f32 0.0, %v1091
        %v1093 = vpop.f32.mrf.mxu0
        %v1094 = vadd.f32 0.0, %v1093
        %1095 = vmatmul.bf16.gmra.mxu0 %v843
        %v1096 = vpop.f32.mrf.mxu0
        %v1097 = vadd.f32 0.0, %v1096
        %v1098 = vpop.f32.mrf.mxu0
        %v1099 = vadd.f32 0.0, %v1098
        %1100 = vmatmul.bf16.gmra.mxu0 %v844
        %v1101 = vpop.f32.mrf.mxu0
        %v1102 = vadd.f32 0.0, %v1101
        %v1103 = vpop.f32.mrf.mxu0
        %v1104 = vadd.f32 0.0, %v1103
        %1105 = vmatmul.bf16.gmra.mxu0 %v845
        %v1106 = vpop.f32.mrf.mxu0
        %v1107 = vadd.f32 0.0, %v1106
        %v1108 = vpop.f32.mrf.mxu0
        %v1109 = vadd.f32 0.0, %v1108
        %1110 = vmatmul.bf16.gmra.mxu0 %v846
        %v1111 = vpop.f32.mrf.mxu0
        %v1112 = vadd.f32 0.0, %v1111
        %v1113 = vpop.f32.mrf.mxu0
        %v1114 = vadd.f32 0.0, %v1113
        %1115 = vmatmul.bf16.gmra.mxu0 %v847
        %v1116 = vpop.f32.mrf.mxu0
        %v1117 = vadd.f32 0.0, %v1116
        %v1118 = vpop.f32.mrf.mxu0
        %v1119 = vadd.f32 0.0, %v1118
        %1120 = vmatmul.bf16.gmra.mxu0 %v848
        %v1121 = vpop.f32.mrf.mxu0
        %v1122 = vadd.f32 0.0, %v1121
        %v1123 = vpop.f32.mrf.mxu0
        %v1124 = vadd.f32 0.0, %v1123
        %1125 = vmatmul.bf16.gmra.mxu0 %v849
        %v1126 = vpop.f32.mrf.mxu0
        %v1127 = vadd.f32 0.0, %v1126
        %v1128 = vpop.f32.mrf.mxu0
        %v1129 = vadd.f32 0.0, %v1128
        %1130 = vmatmul.bf16.gmra.mxu0 %v850
        %v1131 = vpop.f32.mrf.mxu0
        %v1132 = vadd.f32 0.0, %v1131
        %v1133 = vpop.f32.mrf.mxu0
        %v1134 = vadd.f32 0.0, %v1133
        %1135 = vmatmul.bf16.gmra.mxu0 %v851
        %v1136 = vpop.f32.mrf.mxu0
        %v1137 = vadd.f32 0.0, %v1136
        %v1138 = vpop.f32.mrf.mxu0
        %v1139 = vadd.f32 0.0, %v1138
        %1140 = vmatmul.bf16.gmra.mxu0 %v852
        %v1141 = vpop.f32.mrf.mxu0
        %v1142 = vadd.f32 0.0, %v1141
        %v1143 = vpop.f32.mrf.mxu0
        %v1144 = vadd.f32 0.0, %v1143
        %1145 = vmatmul.bf16.gmra.mxu0 %v853
        %v1146 = vpop.f32.mrf.mxu0
        %v1147 = vadd.f32 0.0, %v1146
        %v1148 = vpop.f32.mrf.mxu0
        %v1149 = vadd.f32 0.0, %v1148
        %1150 = vmatmul.bf16.gmra.mxu0 %v854
        %v1151 = vpop.f32.mrf.mxu0
        %v1152 = vadd.f32 0.0, %v1151
        %v1153 = vpop.f32.mrf.mxu0
        %v1154 = vadd.f32 0.0, %v1153
        %1155 = vmatmul.bf16.gmra.mxu0 %v855
        %v1156 = vpop.f32.mrf.mxu0
        %v1157 = vadd.f32 0.0, %v1156
        %v1158 = vpop.f32.mrf.mxu0
        %v1159 = vadd.f32 0.0, %v1158
        %1160 = vmatmul.bf16.gmra.mxu0 %v856
        %v1161 = vpop.f32.mrf.mxu0
        %v1162 = vadd.f32 0.0, %v1161
        %v1163 = vpop.f32.mrf.mxu0
        %v1164 = vadd.f32 0.0, %v1163
        %1165 = vmatmul.bf16.gmra.mxu0 %v857
        %v1166 = vpop.f32.mrf.mxu0
        %v1167 = vadd.f32 0.0, %v1166
        %v1168 = vpop.f32.mrf.mxu0
        %v1169 = vadd.f32 0.0, %v1168
        %1170 = vmatmul.bf16.gmra.mxu0 %v858
        %v1171 = vpop.f32.mrf.mxu0
        %v1172 = vadd.f32 0.0, %v1171
        %v1173 = vpop.f32.mrf.mxu0
        %v1174 = vadd.f32 0.0, %v1173
        %1175 = vmatmul.bf16.gmra.mxu0 %v859
        %v1176 = vpop.f32.mrf.mxu0
        %v1177 = vadd.f32 0.0, %v1176
        %v1178 = vpop.f32.mrf.mxu0
        %v1179 = vadd.f32 0.0, %v1178
        %1180 = vmatmul.bf16.gmra.mxu0 %v860
        %v1181 = vpop.f32.mrf.mxu0
        %v1182 = vadd.f32 0.0, %v1181
        %v1183 = vpop.f32.mrf.mxu0
        %v1184 = vadd.f32 0.0, %v1183
        %1185 = vmatmul.bf16.gmra.mxu0 %v861
        %v1186 = vpop.f32.mrf.mxu0
        %v1187 = vadd.f32 0.0, %v1186
        %v1188 = vpop.f32.mrf.mxu0
        %v1189 = vadd.f32 0.0, %v1188
        %1190 = vmatmul.bf16.gmra.mxu0 %v862
        %v1191 = vpop.f32.mrf.mxu0
        %v1192 = vadd.f32 0.0, %v1191
        %v1193 = vpop.f32.mrf.mxu0
        %v1194 = vadd.f32 0.0, %v1193
        %1195 = vmatmul.bf16.gmra.mxu0 %v863
        %v1196 = vpop.f32.mrf.mxu0
        %v1197 = vadd.f32 0.0, %v1196
        %v1198 = vpop.f32.mrf.mxu0
        %v1199 = vadd.f32 0.0, %v1198
        %1200 = vmatmul.bf16.gmra.mxu0 %v864
        %v1201 = vpop.f32.mrf.mxu0
        %v1202 = vadd.f32 0.0, %v1201
        %v1203 = vpop.f32.mrf.mxu0
        %v1204 = vadd.f32 0.0, %v1203
        %1205 = vmatmul.bf16.gmra.mxu0 %v865
        %v1206 = vpop.f32.mrf.mxu0
        %v1207 = vadd.f32 0.0, %v1206
        %v1208 = vpop.f32.mrf.mxu0
        %v1209 = vadd.f32 0.0, %v1208
        %1210 = vmatmul.bf16.gmra.mxu0 %v866
        %v1211 = vpop.f32.mrf.mxu0
        %v1212 = vadd.f32 0.0, %v1211
        %v1213 = vpop.f32.mrf.mxu0
        %v1214 = vadd.f32 0.0, %v1213
        %1215 = vmatmul.bf16.gmra.mxu0 %v867
        %v1216 = vpop.f32.mrf.mxu0
        %v1217 = vadd.f32 0.0, %v1216
        %v1218 = vpop.f32.mrf.mxu0
        %v1219 = vadd.f32 0.0, %v1218
        %1220 = vmatmul.bf16.gmra.mxu0 %v868
        %v1221 = vpop.f32.mrf.mxu0
        %v1222 = vadd.f32 0.0, %v1221
        %v1223 = vpop.f32.mrf.mxu0
        %v1224 = vadd.f32 0.0, %v1223
        %1225 = vmatmul.bf16.gmra.mxu0 %v869
        %v1226 = vpop.f32.mrf.mxu0
        %v1227 = vadd.f32 0.0, %v1226
        %v1228 = vpop.f32.mrf.mxu0
        %v1229 = vadd.f32 0.0, %v1228
        %1230 = vmatmul.bf16.gmra.mxu0 %v870
        %v1231 = vpop.f32.mrf.mxu0
        %v1232 = vadd.f32 0.0, %v1231
        %v1233 = vpop.f32.mrf.mxu0
        %v1234 = vadd.f32 0.0, %v1233
        %1235 = vmatmul.bf16.gmra.mxu0 %v871
        %v1236 = vpop.f32.mrf.mxu0
        %v1237 = vadd.f32 0.0, %v1236
        %v1238 = vpop.f32.mrf.mxu0
        %v1239 = vadd.f32 0.0, %v1238
        %1240 = vmatmul.bf16.gmra.mxu0 %v872
        %v1241 = vpop.f32.mrf.mxu0
        %v1242 = vadd.f32 0.0, %v1241
        %v1243 = vpop.f32.mrf.mxu0
        %v1244 = vadd.f32 0.0, %v1243
        %1245 = vmatmul.bf16.gmra.mxu0 %v873
        %v1246 = vpop.f32.mrf.mxu0
        %v1247 = vadd.f32 0.0, %v1246
        %v1248 = vpop.f32.mrf.mxu0
        %v1249 = vadd.f32 0.0, %v1248
        %1250 = vmatmul.bf16.gmra.mxu0 %v874
        %v1251 = vpop.f32.mrf.mxu0
        %v1252 = vadd.f32 0.0, %v1251
        %v1253 = vpop.f32.mrf.mxu0
        %1254 = vdwg.mxu0
        %v1255 = vadd.f32 %v377, %v987
        %v1256 = vadd.f32 %v378, %v989
        %v1257 = vadd.f32 %v379, %v992
        %v1258 = vadd.f32 %v380, %v994
        %v1259 = vadd.f32 %v381, %v997
        %v1260 = vadd.f32 %v382, %v999
        %v1261 = vadd.f32 %v383, %v1002
        %v1262 = vadd.f32 %v384, %v1004
        %v1263 = vadd.f32 %v385, %v1007
        %v1264 = vadd.f32 %v386, %v1009
        %v1265 = vadd.f32 %v387, %v1012
        %v1266 = vadd.f32 %v388, %v1014
        %v1267 = vadd.f32 %v389, %v1017
        %v1268 = vadd.f32 %v390, %v1019
        %v1269 = vadd.f32 %v391, %v1022
        %v1270 = vadd.f32 %v392, %v1024
        %v1271 = vadd.f32 %v393, %v1027
        %v1272 = vadd.f32 %v394, %v1029
        %v1273 = vadd.f32 %v395, %v1032
        %v1274 = vadd.f32 %v396, %v1034
        %v1275 = vadd.f32 %v397, %v1037
        %v1276 = vadd.f32 %v398, %v1039
        %v1277 = vadd.f32 %v399, %v1042
        %v1278 = vadd.f32 %v400, %v1044
        %v1279 = vadd.f32 %v401, %v1047
        %v1280 = vadd.f32 %v402, %v1049
        %v1281 = vadd.f32 %v403, %v1052
        %v1282 = vadd.f32 %v404, %v1054
        %v1283 = vadd.f32 %v405, %v1057
        %v1284 = vadd.f32 %v406, %v1059
        %v1285 = vadd.f32 %v407, %v1062
        %v1286 = vadd.f32 %v408, %v1064
        %v1287 = vadd.f32 %v409, %v1067
        %v1288 = vadd.f32 %v410, %v1069
        %v1289 = vadd.f32 %v411, %v1072
        %v1290 = vadd.f32 %v412, %v1074
        %v1291 = vadd.f32 %v413, %v1077
        %v1292 = vadd.f32 %v414, %v1079
        %v1293 = vadd.f32 %v415, %v1082
        %v1294 = vadd.f32 %v416, %v1084
        %v1295 = vadd.f32 %v417, %v1087
        %v1296 = vadd.f32 %v418, %v1089
        %v1297 = vadd.f32 %v419, %v1092
        %v1298 = vadd.f32 %v420, %v1094
        %v1299 = vadd.f32 %v421, %v1097
        %v1300 = vadd.f32 %v422, %v1099
        %v1301 = vadd.f32 %v423, %v1102
        %v1302 = vadd.f32 %v424, %v1104
        %v1303 = vadd.f32 %v425, %v1107
        %v1304 = vadd.f32 %v426, %v1109
        %v1305 = vadd.f32 %v427, %v1112
        %v1306 = vadd.f32 %v428, %v1114
        %v1307 = vadd.f32 %v429, %v1117
        %v1308 = vadd.f32 %v430, %v1119
        %v1309 = vadd.f32 %v431, %v1122
        %v1310 = vadd.f32 %v432, %v1124
        %v1311 = vadd.f32 %v433, %v1127
        %v1312 = vadd.f32 %v434, %v1129
        %v1313 = vadd.f32 %v435, %v1132
        %v1314 = vadd.f32 %v436, %v1134
        %v1315 = vadd.f32 %v437, %v1137
        %v1316 = vadd.f32 %v438, %v1139
        %v1317 = vadd.f32 %v439, %v1142
        %v1318 = vadd.f32 %v440, %v1144
        %v1319 = vadd.f32 %v441, %v1147
        %v1320 = vadd.f32 %v442, %v1149
        %v1321 = vadd.f32 %v443, %v1152
        %v1322 = vadd.f32 %v444, %v1154
        %v1323 = vadd.f32 %v445, %v1157
        %v1324 = vadd.f32 %v446, %v1159
        %v1325 = vadd.f32 %v447, %v1162
        %v1326 = vadd.f32 %v448, %v1164
        %v1327 = vadd.f32 %v449, %v1167
        %v1328 = vadd.f32 %v450, %v1169
        %v1329 = vadd.f32 %v451, %v1172
        %v1330 = vadd.f32 %v452, %v1174
        %v1331 = vadd.f32 %v453, %v1177
        %v1332 = vadd.f32 %v454, %v1179
        %v1333 = vadd.f32 %v455, %v1182
        %v1334 = vadd.f32 %v456, %v1184
        %v1335 = vadd.f32 %v457, %v1187
        %v1336 = vadd.f32 %v458, %v1189
        %v1337 = vadd.f32 %v459, %v1192
        %v1338 = vadd.f32 %v460, %v1194
        %v1339 = vadd.f32 %v461, %v1197
        %v1340 = vadd.f32 %v462, %v1199
        %v1341 = vadd.f32 %v463, %v1202
        %v1342 = vadd.f32 %v464, %v1204
        %v1343 = vadd.f32 %v465, %v1207
        %v1344 = vadd.f32 %v466, %v1209
        %v1345 = vadd.f32 %v467, %v1212
        %v1346 = vadd.f32 %v468, %v1214
        %v1347 = vadd.f32 %v469, %v1217
        %v1348 = vadd.f32 %v470, %v1219
        %v1349 = vadd.f32 %v471, %v1222
        %v1350 = vadd.f32 %v472, %v1224
        %v1351 = vadd.f32 %v473, %v1227
        %v1352 = vadd.f32 %v474, %v1229
        %v1353 = vadd.f32 %v475, %v1232
        %v1354 = vadd.f32 %v476, %v1234
        %v1355 = vadd.f32 %v477, %v1237
        %v1356 = vadd.f32 %v478, %v1239
        %v1357 = vadd.f32 %v479, %v1242
        %v1358 = vadd.f32 %v480, %v1244
        %v1359 = vadd.f32 %v481, %v1247
        %v1360 = vadd.f32 %v482, %v1249
        %v1361 = vadd.f32 %v483, %v1252
        %1362 = vst [vmem:[#allocation2] sm:$0xff] %v1255
        %1363 = vst [vmem:[#allocation2 + $0x8] sm:$0xff] %v1256
        %1364 = vst [vmem:[#allocation2 + $0x10] sm:$0xff] %v1257
        %1365 = vst [vmem:[#allocation2 + $0x18] sm:$0xff] %v1258
        %1366 = vst [vmem:[#allocation2 + $0x20] sm:$0xff] %v1259
        %1367 = vst [vmem:[#allocation2 + $0x28] sm:$0xff] %v1260
        %1368 = vst [vmem:[#allocation2 + $0x30] sm:$0xff] %v1261
        %1369 = vst [vmem:[#allocation2 + $0x38] sm:$0xff] %v1262
        %1370 = vst [vmem:[#allocation2 + $0x40] sm:$0xff] %v1263
        %1371 = vst [vmem:[#allocation2 + $0x48] sm:$0xff] %v1264
        %1372 = vst [vmem:[#allocation2 + $0x50] sm:$0xff] %v1265
        %1373 = vst [vmem:[#allocation2 + $0x58] sm:$0xff] %v1266
        %1374 = vst [vmem:[#allocation2 + $0x60] sm:$0xff] %v1267
        %1375 = vst [vmem:[#allocation2 + $0x68] sm:$0xff] %v1268
        %1376 = vst [vmem:[#allocation2 + $0x70] sm:$0xff] %v1269
        %1377 = vst [vmem:[#allocation2 + $0x78] sm:$0xff] %v1270
        %1378 = vst [vmem:[#allocation2 + $0x80] sm:$0xff] %v1271
        %1379 = vst [vmem:[#allocation2 + $0x88] sm:$0xff] %v1272
        %1380 = vst [vmem:[#allocation2 + $0x90] sm:$0xff] %v1273
        %1381 = vst [vmem:[#allocation2 + $0x98] sm:$0xff] %v1274
        %1382 = vst [vmem:[#allocation2 + $0xa0] sm:$0xff] %v1275
        %1383 = vst [vmem:[#allocation2 + $0xa8] sm:$0xff] %v1276
        %1384 = vst [vmem:[#allocation2 + $0xb0] sm:$0xff] %v1277
        %1385 = vst [vmem:[#allocation2 + $0xb8] sm:$0xff] %v1278
        %1386 = vst [vmem:[#allocation2 + $0xc0] sm:$0xff] %v1279
        %1387 = vst [vmem:[#allocation2 + $0xc8] sm:$0xff] %v1280
        %1388 = vst [vmem:[#allocation2 + $0xd0] sm:$0xff] %v1281
        %1389 = vst [vmem:[#allocation2 + $0xd8] sm:$0xff] %v1282
        %1390 = vst [vmem:[#allocation2 + $0xe0] sm:$0xff] %v1283
        %1391 = vst [vmem:[#allocation2 + $0xe8] sm:$0xff] %v1284
        %1392 = vst [vmem:[#allocation2 + $0xf0] sm:$0xff] %v1285
        %1393 = vst [vmem:[#allocation2 + $0xf8] sm:$0xff] %v1286
        %1394 = vst [vmem:[#allocation2 + $0x100] sm:$0xff] %v1287
        %1395 = vst [vmem:[#allocation2 + $0x108] sm:$0xff] %v1288
        %1396 = vst [vmem:[#allocation2 + $0x110] sm:$0xff] %v1289
        %1397 = vst [vmem:[#allocation2 + $0x118] sm:$0xff] %v1290
        %1398 = vst [vmem:[#allocation2 + $0x120] sm:$0xff] %v1291
        %1399 = vst [vmem:[#allocation2 + $0x128] sm:$0xff] %v1292
        %1400 = vst [vmem:[#allocation2 + $0x130] sm:$0xff] %v1293
        %1401 = vst [vmem:[#allocation2 + $0x138] sm:$0xff] %v1294
        %1402 = vst [vmem:[#allocation2 + $0x140] sm:$0xff] %v1295
        %1403 = vst [vmem:[#allocation2 + $0x148] sm:$0xff] %v1296
        %1404 = vst [vmem:[#allocation2 + $0x150] sm:$0xff] %v1297
        %1405 = vst [vmem:[#allocation2 + $0x158] sm:$0xff] %v1298
        %1406 = vst [vmem:[#allocation2 + $0x160] sm:$0xff] %v1299
        %1407 = vst [vmem:[#allocation2 + $0x168] sm:$0xff] %v1300
        %1408 = vst [vmem:[#allocation2 + $0x170] sm:$0xff] %v1301
        %1409 = vst [vmem:[#allocation2 + $0x178] sm:$0xff] %v1302
        %1410 = vst [vmem:[#allocation2 + $0x180] sm:$0xff] %v1303
        %1411 = vst [vmem:[#allocation2 + $0x188] sm:$0xff] %v1304
        %1412 = vst [vmem:[#allocation2 + $0x190] sm:$0xff] %v1305
        %1413 = vst [vmem:[#allocation2 + $0x198] sm:$0xff] %v1306
        %1414 = vst [vmem:[#allocation2 + $0x1a0] sm:$0xff] %v1307
        %1415 = vst [vmem:[#allocation2 + $0x1a8] sm:$0xff] %v1308
        %1416 = vst [vmem:[#allocation2 + $0x1b0] sm:$0xff] %v1309
        %1417 = vst [vmem:[#allocation2 + $0x1b8] sm:$0xff] %v1310
        %1418 = vst [vmem:[#allocation2 + $0x1c0] sm:$0xff] %v1311
        %1419 = vst [vmem:[#allocation2 + $0x1c8] sm:$0xff] %v1312
        %1420 = vst [vmem:[#allocation2 + $0x1d0] sm:$0xff] %v1313
        %1421 = vst [vmem:[#allocation2 + $0x1d8] sm:$0xff] %v1314
        %1422 = vst [vmem:[#allocation2 + $0x1e0] sm:$0xff] %v1315
        %1423 = vst [vmem:[#allocation2 + $0x1e8] sm:$0xff] %v1316
        %1424 = vst [vmem:[#allocation2 + $0x1f0] sm:$0xff] %v1317
        %1425 = vst [vmem:[#allocation2 + $0x1f8] sm:$0xff] %v1318
        %1426 = vst [vmem:[#allocation2 + $0x200] sm:$0xff] %v1319
        %1427 = vst [vmem:[#allocation2 + $0x208] sm:$0xff] %v1320
        %1428 = vst [vmem:[#allocation2 + $0x210] sm:$0xff] %v1321
        %1429 = vst [vmem:[#allocation2 + $0x218] sm:$0xff] %v1322
        %1430 = vst [vmem:[#allocation2 + $0x220] sm:$0xff] %v1323
        %1431 = vst [vmem:[#allocation2 + $0x228] sm:$0xff] %v1324
        %1432 = vst [vmem:[#allocation2 + $0x230] sm:$0xff] %v1325
        %1433 = vst [vmem:[#allocation2 + $0x238] sm:$0xff] %v1326
        %1434 = vst [vmem:[#allocation2 + $0x240] sm:$0xff] %v1327
        %1435 = vst [vmem:[#allocation2 + $0x248] sm:$0xff] %v1328
        %1436 = vst [vmem:[#allocation2 + $0x250] sm:$0xff] %v1329
        %1437 = vst [vmem:[#allocation2 + $0x258] sm:$0xff] %v1330
        %1438 = vst [vmem:[#allocation2 + $0x260] sm:$0xff] %v1331
        %1439 = vst [vmem:[#allocation2 + $0x268] sm:$0xff] %v1332
        %1440 = vst [vmem:[#allocation2 + $0x270] sm:$0xff] %v1333
        %1441 = vst [vmem:[#allocation2 + $0x278] sm:$0xff] %v1334
        %1442 = vst [vmem:[#allocation2 + $0x280] sm:$0xff] %v1335
        %1443 = vst [vmem:[#allocation2 + $0x288] sm:$0xff] %v1336
        %1444 = vst [vmem:[#allocation2 + $0x290] sm:$0xff] %v1337
        %1445 = vst [vmem:[#allocation2 + $0x298] sm:$0xff] %v1338
        %1446 = vst [vmem:[#allocation2 + $0x2a0] sm:$0xff] %v1339
        %1447 = vst [vmem:[#allocation2 + $0x2a8] sm:$0xff] %v1340
        %1448 = vst [vmem:[#allocation2 + $0x2b0] sm:$0xff] %v1341
        %1449 = vst [vmem:[#allocation2 + $0x2b8] sm:$0xff] %v1342
        %1450 = vst [vmem:[#allocation2 + $0x2c0] sm:$0xff] %v1343
        %1451 = vst [vmem:[#allocation2 + $0x2c8] sm:$0xff] %v1344
        %1452 = vst [vmem:[#allocation2 + $0x2d0] sm:$0xff] %v1345
        %1453 = vst [vmem:[#allocation2 + $0x2d8] sm:$0xff] %v1346
        %1454 = vst [vmem:[#allocation2 + $0x2e0] sm:$0xff] %v1347
        %1455 = vst [vmem:[#allocation2 + $0x2e8] sm:$0xff] %v1348
        %1456 = vst [vmem:[#allocation2 + $0x2f0] sm:$0xff] %v1349
        %1457 = vst [vmem:[#allocation2 + $0x2f8] sm:$0xff] %v1350
        %1458 = vst [vmem:[#allocation2 + $0x300] sm:$0xff] %v1351
        %1459 = vst [vmem:[#allocation2 + $0x308] sm:$0xff] %v1352
        %1460 = vst [vmem:[#allocation2 + $0x310] sm:$0xff] %v1353
        %1461 = vst [vmem:[#allocation2 + $0x318] sm:$0xff] %v1354
        %1462 = vst [vmem:[#allocation2 + $0x320] sm:$0xff] %v1355
        %1463 = vst [vmem:[#allocation2 + $0x328] sm:$0xff] %v1356
        %1464 = vst [vmem:[#allocation2 + $0x330] sm:$0xff] %v1357
        %1465 = vst [vmem:[#allocation2 + $0x338] sm:$0xff] %v1358
        %1466 = vst [vmem:[#allocation2 + $0x340] sm:$0xff] %v1359
        %1467 = vst [vmem:[#allocation2 + $0x348] sm:$0xff] %v1360
        %1468 = vst [vmem:[#allocation2 + $0x350] sm:$0xff] %v1361
        // Predicated region
        $region49: #{tpu_custom_call.1} parent=31 // pred_check
          %p1469 = pneg %p266
        $region50: #{tpu_custom_call.1} parent=31 // pred_check_branch
          %1471 = sbr.rel (%p1469) target = $region52
        $region51: #{tpu_custom_call.1} parent=31 // pred_region
          %v1472 = vld [vmem:[#allocation2] sm:$0xff]
          %v1473 = vld [vmem:[#allocation2 + $0x8] sm:$0xff]
          %v1474 = vld [vmem:[#allocation2 + $0x10] sm:$0xff]
          %v1475 = vld [vmem:[#allocation2 + $0x18] sm:$0xff]
          %v1476 = vld [vmem:[#allocation2 + $0x20] sm:$0xff]
          %v1477 = vld [vmem:[#allocation2 + $0x28] sm:$0xff]
          %v1478 = vld [vmem:[#allocation2 + $0x30] sm:$0xff]
          %v1479 = vld [vmem:[#allocation2 + $0x38] sm:$0xff]
          %v1480 = vld [vmem:[#allocation2 + $0x40] sm:$0xff]
          %v1481 = vld [vmem:[#allocation2 + $0x48] sm:$0xff]
          %v1482 = vld [vmem:[#allocation2 + $0x50] sm:$0xff]
          %v1483 = vld [vmem:[#allocation2 + $0x58] sm:$0xff]
          %v1484 = vld [vmem:[#allocation2 + $0x60] sm:$0xff]
          %v1485 = vld [vmem:[#allocation2 + $0x68] sm:$0xff]
          %v1486 = vld [vmem:[#allocation2 + $0x70] sm:$0xff]
          %v1487 = vld [vmem:[#allocation2 + $0x78] sm:$0xff]
          %v1488 = vld [vmem:[#allocation2 + $0x80] sm:$0xff]
          %v1489 = vld [vmem:[#allocation2 + $0x88] sm:$0xff]
          %v1490 = vld [vmem:[#allocation2 + $0x90] sm:$0xff]
          %v1491 = vld [vmem:[#allocation2 + $0x98] sm:$0xff]
          %v1492 = vld [vmem:[#allocation2 + $0xa0] sm:$0xff]
          %v1493 = vld [vmem:[#allocation2 + $0xa8] sm:$0xff]
          %v1494 = vld [vmem:[#allocation2 + $0xb0] sm:$0xff]
          %v1495 = vld [vmem:[#allocation2 + $0xb8] sm:$0xff]
          %v1496 = vld [vmem:[#allocation2 + $0xc0] sm:$0xff]
          %v1497 = vld [vmem:[#allocation2 + $0xc8] sm:$0xff]
          %v1498 = vld [vmem:[#allocation2 + $0xd0] sm:$0xff]
          %v1499 = vld [vmem:[#allocation2 + $0xd8] sm:$0xff]
          %v1500 = vld [vmem:[#allocation2 + $0xe0] sm:$0xff]
          %v1501 = vld [vmem:[#allocation2 + $0xe8] sm:$0xff]
          %v1502 = vld [vmem:[#allocation2 + $0xf0] sm:$0xff]
          %v1503 = vld [vmem:[#allocation2 + $0xf8] sm:$0xff]
          %v1504 = vld [vmem:[#allocation2 + $0x100] sm:$0xff]
          %v1505 = vld [vmem:[#allocation2 + $0x108] sm:$0xff]
          %v1506 = vld [vmem:[#allocation2 + $0x110] sm:$0xff]
          %v1507 = vld [vmem:[#allocation2 + $0x118] sm:$0xff]
          %v1508 = vld [vmem:[#allocation2 + $0x120] sm:$0xff]
          %v1509 = vld [vmem:[#allocation2 + $0x128] sm:$0xff]
          %v1510 = vld [vmem:[#allocation2 + $0x130] sm:$0xff]
          %v1511 = vld [vmem:[#allocation2 + $0x138] sm:$0xff]
          %v1512 = vld [vmem:[#allocation2 + $0x140] sm:$0xff]
          %v1513 = vld [vmem:[#allocation2 + $0x148] sm:$0xff]
          %v1514 = vld [vmem:[#allocation2 + $0x150] sm:$0xff]
          %v1515 = vld [vmem:[#allocation2 + $0x158] sm:$0xff]
          %v1516 = vld [vmem:[#allocation2 + $0x160] sm:$0xff]
          %v1517 = vld [vmem:[#allocation2 + $0x168] sm:$0xff]
          %v1518 = vld [vmem:[#allocation2 + $0x170] sm:$0xff]
          %v1519 = vld [vmem:[#allocation2 + $0x178] sm:$0xff]
          %v1520 = vld [vmem:[#allocation2 + $0x180] sm:$0xff]
          %v1521 = vld [vmem:[#allocation2 + $0x188] sm:$0xff]
          %v1522 = vld [vmem:[#allocation2 + $0x190] sm:$0xff]
          %v1523 = vld [vmem:[#allocation2 + $0x198] sm:$0xff]
          %v1524 = vld [vmem:[#allocation2 + $0x1a0] sm:$0xff]
          %v1525 = vld [vmem:[#allocation2 + $0x1a8] sm:$0xff]
          %v1526 = vld [vmem:[#allocation2 + $0x1b0] sm:$0xff]
          %v1527 = vld [vmem:[#allocation2 + $0x1b8] sm:$0xff]
          %v1528 = vld [vmem:[#allocation2 + $0x1c0] sm:$0xff]
          %v1529 = vld [vmem:[#allocation2 + $0x1c8] sm:$0xff]
          %v1530 = vld [vmem:[#allocation2 + $0x1d0] sm:$0xff]
          %v1531 = vld [vmem:[#allocation2 + $0x1d8] sm:$0xff]
          %v1532 = vld [vmem:[#allocation2 + $0x1e0] sm:$0xff]
          %v1533 = vld [vmem:[#allocation2 + $0x1e8] sm:$0xff]
          %v1534 = vld [vmem:[#allocation2 + $0x1f0] sm:$0xff]
          %v1535 = vld [vmem:[#allocation2 + $0x1f8] sm:$0xff]
          %v1536 = vld [vmem:[#allocation2 + $0x200] sm:$0xff]
          %v1537 = vld [vmem:[#allocation2 + $0x208] sm:$0xff]
          %v1538 = vld [vmem:[#allocation2 + $0x210] sm:$0xff]
          %v1539 = vld [vmem:[#allocation2 + $0x218] sm:$0xff]
          %v1540 = vld [vmem:[#allocation2 + $0x220] sm:$0xff]
          %v1541 = vld [vmem:[#allocation2 + $0x228] sm:$0xff]
          %v1542 = vld [vmem:[#allocation2 + $0x230] sm:$0xff]
          %v1543 = vld [vmem:[#allocation2 + $0x238] sm:$0xff]
          %v1544 = vld [vmem:[#allocation2 + $0x240] sm:$0xff]
          %v1545 = vld [vmem:[#allocation2 + $0x248] sm:$0xff]
          %v1546 = vld [vmem:[#allocation2 + $0x250] sm:$0xff]
          %v1547 = vld [vmem:[#allocation2 + $0x258] sm:$0xff]
          %v1548 = vld [vmem:[#allocation2 + $0x260] sm:$0xff]
          %v1549 = vld [vmem:[#allocation2 + $0x268] sm:$0xff]
          %v1550 = vld [vmem:[#allocation2 + $0x270] sm:$0xff]
          %v1551 = vld [vmem:[#allocation2 + $0x278] sm:$0xff]
          %v1552 = vld [vmem:[#allocation2 + $0x280] sm:$0xff]
          %v1553 = vld [vmem:[#allocation2 + $0x288] sm:$0xff]
          %v1554 = vld [vmem:[#allocation2 + $0x290] sm:$0xff]
          %v1555 = vld [vmem:[#allocation2 + $0x298] sm:$0xff]
          %v1556 = vld [vmem:[#allocation2 + $0x2a0] sm:$0xff]
          %v1557 = vld [vmem:[#allocation2 + $0x2a8] sm:$0xff]
          %v1558 = vld [vmem:[#allocation2 + $0x2b0] sm:$0xff]
          %v1559 = vld [vmem:[#allocation2 + $0x2b8] sm:$0xff]
          %v1560 = vld [vmem:[#allocation2 + $0x2c0] sm:$0xff]
          %v1561 = vld [vmem:[#allocation2 + $0x2c8] sm:$0xff]
          %v1562 = vld [vmem:[#allocation2 + $0x2d0] sm:$0xff]
          %v1563 = vld [vmem:[#allocation2 + $0x2d8] sm:$0xff]
          %v1564 = vld [vmem:[#allocation2 + $0x2e0] sm:$0xff]
          %v1565 = vld [vmem:[#allocation2 + $0x2e8] sm:$0xff]
          %v1566 = vld [vmem:[#allocation2 + $0x2f0] sm:$0xff]
          %v1567 = vld [vmem:[#allocation2 + $0x2f8] sm:$0xff]
          %v1568 = vld [vmem:[#allocation2 + $0x300] sm:$0xff]
          %v1569 = vld [vmem:[#allocation2 + $0x308] sm:$0xff]
          %v1570 = vld [vmem:[#allocation2 + $0x310] sm:$0xff]
          %v1571 = vld [vmem:[#allocation2 + $0x318] sm:$0xff]
          %v1572 = vld [vmem:[#allocation2 + $0x320] sm:$0xff]
          %v1573 = vld [vmem:[#allocation2 + $0x328] sm:$0xff]
          %v1574 = vld [vmem:[#allocation2 + $0x330] sm:$0xff]
          %v1575 = vld [vmem:[#allocation2 + $0x338] sm:$0xff]
          %v1576 = vld [vmem:[#allocation2 + $0x340] sm:$0xff]
          %v1577 = vld [vmem:[#allocation2 + $0x348] sm:$0xff]
          %v1578 = vld [vmem:[#allocation2 + $0x350] sm:$0xff]
          %v1579 = vld [vmem:[#allocation8] sm:$0x1]
          %v1581 = vperm.slane %v1579, 0
          %v1583 = vadd.f32 %v1472, %v1581
          %v1584 = vadd.f32 %v1473, %v1581
          %v1585 = vadd.f32 %v1474, %v1581
          %v1586 = vadd.f32 %v1475, %v1581
          %v1587 = vadd.f32 %v1476, %v1581
          %v1588 = vadd.f32 %v1477, %v1581
          %v1589 = vadd.f32 %v1478, %v1581
          %v1590 = vadd.f32 %v1479, %v1581
          %v1591 = vadd.f32 %v1480, %v1581
          %v1592 = vadd.f32 %v1481, %v1581
          %v1593 = vadd.f32 %v1482, %v1581
          %v1594 = vadd.f32 %v1483, %v1581
          %v1595 = vadd.f32 %v1484, %v1581
          %v1596 = vadd.f32 %v1485, %v1581
          %v1597 = vadd.f32 %v1486, %v1581
          %v1598 = vadd.f32 %v1487, %v1581
          %v1599 = vadd.f32 %v1488, %v1581
          %v1600 = vadd.f32 %v1489, %v1581
          %v1601 = vadd.f32 %v1490, %v1581
          %v1602 = vadd.f32 %v1491, %v1581
          %v1603 = vadd.f32 %v1492, %v1581
          %v1604 = vadd.f32 %v1493, %v1581
          %v1605 = vadd.f32 %v1494, %v1581
          %v1606 = vadd.f32 %v1495, %v1581
          %v1607 = vadd.f32 %v1496, %v1581
          %v1608 = vadd.f32 %v1497, %v1581
          %v1609 = vadd.f32 %v1498, %v1581
          %v1610 = vadd.f32 %v1499, %v1581
          %v1611 = vadd.f32 %v1500, %v1581
          %v1612 = vadd.f32 %v1501, %v1581
          %v1613 = vadd.f32 %v1502, %v1581
          %v1614 = vadd.f32 %v1503, %v1581
          %v1615 = vadd.f32 %v1504, %v1581
          %v1616 = vadd.f32 %v1505, %v1581
          %v1617 = vadd.f32 %v1506, %v1581
          %v1618 = vadd.f32 %v1507, %v1581
          %v1619 = vadd.f32 %v1508, %v1581
          %v1620 = vadd.f32 %v1509, %v1581
          %v1621 = vadd.f32 %v1510, %v1581
          %v1622 = vadd.f32 %v1511, %v1581
          %v1623 = vadd.f32 %v1512, %v1581
          %v1624 = vadd.f32 %v1513, %v1581
          %v1625 = vadd.f32 %v1514, %v1581
          %v1626 = vadd.f32 %v1515, %v1581
          %v1627 = vadd.f32 %v1516, %v1581
          %v1628 = vadd.f32 %v1517, %v1581
          %v1629 = vadd.f32 %v1518, %v1581
          %v1630 = vadd.f32 %v1519, %v1581
          %v1631 = vadd.f32 %v1520, %v1581
          %v1632 = vadd.f32 %v1521, %v1581
          %v1633 = vadd.f32 %v1522, %v1581
          %v1634 = vadd.f32 %v1523, %v1581
          %v1635 = vadd.f32 %v1524, %v1581
          %v1636 = vadd.f32 %v1525, %v1581
          %v1637 = vadd.f32 %v1526, %v1581
          %v1638 = vadd.f32 %v1527, %v1581
          %v1639 = vadd.f32 %v1528, %v1581
          %v1640 = vadd.f32 %v1529, %v1581
          %v1641 = vadd.f32 %v1530, %v1581
          %v1642 = vadd.f32 %v1531, %v1581
          %v1643 = vadd.f32 %v1532, %v1581
          %v1644 = vadd.f32 %v1533, %v1581
          %v1645 = vadd.f32 %v1534, %v1581
          %v1646 = vadd.f32 %v1535, %v1581
          %v1647 = vadd.f32 %v1536, %v1581
          %v1648 = vadd.f32 %v1537, %v1581
          %v1649 = vadd.f32 %v1538, %v1581
          %v1650 = vadd.f32 %v1539, %v1581
          %v1651 = vadd.f32 %v1540, %v1581
          %v1652 = vadd.f32 %v1541, %v1581
          %v1653 = vadd.f32 %v1542, %v1581
          %v1654 = vadd.f32 %v1543, %v1581
          %v1655 = vadd.f32 %v1544, %v1581
          %v1656 = vadd.f32 %v1545, %v1581
          %v1657 = vadd.f32 %v1546, %v1581
          %v1658 = vadd.f32 %v1547, %v1581
          %v1659 = vadd.f32 %v1548, %v1581
          %v1660 = vadd.f32 %v1549, %v1581
          %v1661 = vadd.f32 %v1550, %v1581
          %v1662 = vadd.f32 %v1551, %v1581
          %v1663 = vadd.f32 %v1552, %v1581
          %v1664 = vadd.f32 %v1553, %v1581
          %v1665 = vadd.f32 %v1554, %v1581
          %v1666 = vadd.f32 %v1555, %v1581
          %v1667 = vadd.f32 %v1556, %v1581
          %v1668 = vadd.f32 %v1557, %v1581
          %v1669 = vadd.f32 %v1558, %v1581
          %v1670 = vadd.f32 %v1559, %v1581
          %v1671 = vadd.f32 %v1560, %v1581
          %v1672 = vadd.f32 %v1561, %v1581
          %v1673 = vadd.f32 %v1562, %v1581
          %v1674 = vadd.f32 %v1563, %v1581
          %v1675 = vadd.f32 %v1564, %v1581
          %v1676 = vadd.f32 %v1565, %v1581
          %v1677 = vadd.f32 %v1566, %v1581
          %v1678 = vadd.f32 %v1567, %v1581
          %v1679 = vadd.f32 %v1568, %v1581
          %v1680 = vadd.f32 %v1569, %v1581
          %v1681 = vadd.f32 %v1570, %v1581
          %v1682 = vadd.f32 %v1571, %v1581
          %v1683 = vadd.f32 %v1572, %v1581
          %v1684 = vadd.f32 %v1573, %v1581
          %v1685 = vadd.f32 %v1574, %v1581
          %v1686 = vadd.f32 %v1575, %v1581
          %v1687 = vadd.f32 %v1576, %v1581
          %v1688 = vadd.f32 %v1577, %v1581
          %v1689 = vadd.f32 %v1578, %v1581
          %v1690 = vmax.f32 %v1583, 0.0
          %v1691 = vmax.f32 %v1584, 0.0
          %v1692 = vmax.f32 %v1585, 0.0
          %v1693 = vmax.f32 %v1586, 0.0
          %v1694 = vmax.f32 %v1587, 0.0
          %v1695 = vmax.f32 %v1588, 0.0
          %v1696 = vmax.f32 %v1589, 0.0
          %v1697 = vmax.f32 %v1590, 0.0
          %v1698 = vmax.f32 %v1591, 0.0
          %v1699 = vmax.f32 %v1592, 0.0
          %v1700 = vmax.f32 %v1593, 0.0
          %v1701 = vmax.f32 %v1594, 0.0
          %v1702 = vmax.f32 %v1595, 0.0
          %v1703 = vmax.f32 %v1596, 0.0
          %v1704 = vmax.f32 %v1597, 0.0
          %v1705 = vmax.f32 %v1598, 0.0
          %v1706 = vmax.f32 %v1599, 0.0
          %v1707 = vmax.f32 %v1600, 0.0
          %v1708 = vmax.f32 %v1601, 0.0
          %v1709 = vmax.f32 %v1602, 0.0
          %v1710 = vmax.f32 %v1603, 0.0
          %v1711 = vmax.f32 %v1604, 0.0
          %v1712 = vmax.f32 %v1605, 0.0
          %v1713 = vmax.f32 %v1606, 0.0
          %v1714 = vmax.f32 %v1607, 0.0
          %v1715 = vmax.f32 %v1608, 0.0
          %v1716 = vmax.f32 %v1609, 0.0
          %v1717 = vmax.f32 %v1610, 0.0
          %v1718 = vmax.f32 %v1611, 0.0
          %v1719 = vmax.f32 %v1612, 0.0
          %v1720 = vmax.f32 %v1613, 0.0
          %v1721 = vmax.f32 %v1614, 0.0
          %v1722 = vmax.f32 %v1615, 0.0
          %v1723 = vmax.f32 %v1616, 0.0
          %v1724 = vmax.f32 %v1617, 0.0
          %v1725 = vmax.f32 %v1618, 0.0
          %v1726 = vmax.f32 %v1619, 0.0
          %v1727 = vmax.f32 %v1620, 0.0
          %v1728 = vmax.f32 %v1621, 0.0
          %v1729 = vmax.f32 %v1622, 0.0
          %v1730 = vmax.f32 %v1623, 0.0
          %v1731 = vmax.f32 %v1624, 0.0
          %v1732 = vmax.f32 %v1625, 0.0
          %v1733 = vmax.f32 %v1626, 0.0
          %v1734 = vmax.f32 %v1627, 0.0
          %v1735 = vmax.f32 %v1628, 0.0
          %v1736 = vmax.f32 %v1629, 0.0
          %v1737 = vmax.f32 %v1630, 0.0
          %v1738 = vmax.f32 %v1631, 0.0
          %v1739 = vmax.f32 %v1632, 0.0
          %v1740 = vmax.f32 %v1633, 0.0
          %v1741 = vmax.f32 %v1634, 0.0
          %v1742 = vmax.f32 %v1635, 0.0
          %v1743 = vmax.f32 %v1636, 0.0
          %v1744 = vmax.f32 %v1637, 0.0
          %v1745 = vmax.f32 %v1638, 0.0
          %v1746 = vmax.f32 %v1639, 0.0
          %v1747 = vmax.f32 %v1640, 0.0
          %v1748 = vmax.f32 %v1641, 0.0
          %v1749 = vmax.f32 %v1642, 0.0
          %v1750 = vmax.f32 %v1643, 0.0
          %v1751 = vmax.f32 %v1644, 0.0
          %v1752 = vmax.f32 %v1645, 0.0
          %v1753 = vmax.f32 %v1646, 0.0
          %v1754 = vmax.f32 %v1647, 0.0
          %v1755 = vmax.f32 %v1648, 0.0
          %v1756 = vmax.f32 %v1649, 0.0
          %v1757 = vmax.f32 %v1650, 0.0
          %v1758 = vmax.f32 %v1651, 0.0
          %v1759 = vmax.f32 %v1652, 0.0
          %v1760 = vmax.f32 %v1653, 0.0
          %v1761 = vmax.f32 %v1654, 0.0
          %v1762 = vmax.f32 %v1655, 0.0
          %v1763 = vmax.f32 %v1656, 0.0
          %v1764 = vmax.f32 %v1657, 0.0
          %v1765 = vmax.f32 %v1658, 0.0
          %v1766 = vmax.f32 %v1659, 0.0
          %v1767 = vmax.f32 %v1660, 0.0
          %v1768 = vmax.f32 %v1661, 0.0
          %v1769 = vmax.f32 %v1662, 0.0
          %v1770 = vmax.f32 %v1663, 0.0
          %v1771 = vmax.f32 %v1664, 0.0
          %v1772 = vmax.f32 %v1665, 0.0
          %v1773 = vmax.f32 %v1666, 0.0
          %v1774 = vmax.f32 %v1667, 0.0
          %v1775 = vmax.f32 %v1668, 0.0
          %v1776 = vmax.f32 %v1669, 0.0
          %v1777 = vmax.f32 %v1670, 0.0
          %v1778 = vmax.f32 %v1671, 0.0
          %v1779 = vmax.f32 %v1672, 0.0
          %v1780 = vmax.f32 %v1673, 0.0
          %v1781 = vmax.f32 %v1674, 0.0
          %v1782 = vmax.f32 %v1675, 0.0
          %v1783 = vmax.f32 %v1676, 0.0
          %v1784 = vmax.f32 %v1677, 0.0
          %v1785 = vmax.f32 %v1678, 0.0
          %v1786 = vmax.f32 %v1679, 0.0
          %v1787 = vmax.f32 %v1680, 0.0
          %v1788 = vmax.f32 %v1681, 0.0
          %v1789 = vmax.f32 %v1682, 0.0
          %v1790 = vmax.f32 %v1683, 0.0
          %v1791 = vmax.f32 %v1684, 0.0
          %v1792 = vmax.f32 %v1685, 0.0
          %v1793 = vmax.f32 %v1686, 0.0
          %v1794 = vmax.f32 %v1687, 0.0
          %v1795 = vmax.f32 %v1688, 0.0
          %v1796 = vmax.f32 %v1689, 0.0
          %v1797 = vpack.c.bf16 %v1690, %v1690
          %v1798 = vpack.c.bf16 %v1691, %v1691
          %v1799 = vpack.c.bf16 %v1692, %v1692
          %v1800 = vpack.c.bf16 %v1693, %v1693
          %v1801 = vpack.c.bf16 %v1694, %v1694
          %v1802 = vpack.c.bf16 %v1695, %v1695
          %v1803 = vpack.c.bf16 %v1696, %v1696
          %v1804 = vpack.c.bf16 %v1697, %v1697
          %v1805 = vpack.c.bf16 %v1698, %v1698
          %v1806 = vpack.c.bf16 %v1699, %v1699
          %v1807 = vpack.c.bf16 %v1700, %v1700
          %v1808 = vpack.c.bf16 %v1701, %v1701
          %v1809 = vpack.c.bf16 %v1702, %v1702
          %v1810 = vpack.c.bf16 %v1703, %v1703
          %v1811 = vpack.c.bf16 %v1704, %v1704
          %v1812 = vpack.c.bf16 %v1705, %v1705
          %v1813 = vpack.c.bf16 %v1706, %v1706
          %v1814 = vpack.c.bf16 %v1707, %v1707
          %v1815 = vpack.c.bf16 %v1708, %v1708
          %v1816 = vpack.c.bf16 %v1709, %v1709
          %v1817 = vpack.c.bf16 %v1710, %v1710
          %v1818 = vpack.c.bf16 %v1711, %v1711
          %v1819 = vpack.c.bf16 %v1712, %v1712
          %v1820 = vpack.c.bf16 %v1713, %v1713
          %v1821 = vpack.c.bf16 %v1714, %v1714
          %v1822 = vpack.c.bf16 %v1715, %v1715
          %v1823 = vpack.c.bf16 %v1716, %v1716
          %v1824 = vpack.c.bf16 %v1717, %v1717
          %v1825 = vpack.c.bf16 %v1718, %v1718
          %v1826 = vpack.c.bf16 %v1719, %v1719
          %v1827 = vpack.c.bf16 %v1720, %v1720
          %v1828 = vpack.c.bf16 %v1721, %v1721
          %v1829 = vpack.c.bf16 %v1722, %v1722
          %v1830 = vpack.c.bf16 %v1723, %v1723
          %v1831 = vpack.c.bf16 %v1724, %v1724
          %v1832 = vpack.c.bf16 %v1725, %v1725
          %v1833 = vpack.c.bf16 %v1726, %v1726
          %v1834 = vpack.c.bf16 %v1727, %v1727
          %v1835 = vpack.c.bf16 %v1728, %v1728
          %v1836 = vpack.c.bf16 %v1729, %v1729
          %v1837 = vpack.c.bf16 %v1730, %v1730
          %v1838 = vpack.c.bf16 %v1731, %v1731
          %v1839 = vpack.c.bf16 %v1732, %v1732
          %v1840 = vpack.c.bf16 %v1733, %v1733
          %v1841 = vpack.c.bf16 %v1734, %v1734
          %v1842 = vpack.c.bf16 %v1735, %v1735
          %v1843 = vpack.c.bf16 %v1736, %v1736
          %v1844 = vpack.c.bf16 %v1737, %v1737
          %v1845 = vpack.c.bf16 %v1738, %v1738
          %v1846 = vpack.c.bf16 %v1739, %v1739
          %v1847 = vpack.c.bf16 %v1740, %v1740
          %v1848 = vpack.c.bf16 %v1741, %v1741
          %v1849 = vpack.c.bf16 %v1742, %v1742
          %v1850 = vpack.c.bf16 %v1743, %v1743
          %v1851 = vpack.c.bf16 %v1744, %v1744
          %v1852 = vpack.c.bf16 %v1745, %v1745
          %v1853 = vpack.c.bf16 %v1746, %v1746
          %v1854 = vpack.c.bf16 %v1747, %v1747
          %v1855 = vpack.c.bf16 %v1748, %v1748
          %v1856 = vpack.c.bf16 %v1749, %v1749
          %v1857 = vpack.c.bf16 %v1750, %v1750
          %v1858 = vpack.c.bf16 %v1751, %v1751
          %v1859 = vpack.c.bf16 %v1752, %v1752
          %v1860 = vpack.c.bf16 %v1753, %v1753
          %v1861 = vpack.c.bf16 %v1754, %v1754
          %v1862 = vpack.c.bf16 %v1755, %v1755
          %v1863 = vpack.c.bf16 %v1756, %v1756
          %v1864 = vpack.c.bf16 %v1757, %v1757
          %v1865 = vpack.c.bf16 %v1758, %v1758
          %v1866 = vpack.c.bf16 %v1759, %v1759
          %v1867 = vpack.c.bf16 %v1760, %v1760
          %v1868 = vpack.c.bf16 %v1761, %v1761
          %v1869 = vpack.c.bf16 %v1762, %v1762
          %v1870 = vpack.c.bf16 %v1763, %v1763
          %v1871 = vpack.c.bf16 %v1764, %v1764
          %v1872 = vpack.c.bf16 %v1765, %v1765
          %v1873 = vpack.c.bf16 %v1766, %v1766
          %v1874 = vpack.c.bf16 %v1767, %v1767
          %v1875 = vpack.c.bf16 %v1768, %v1768
          %v1876 = vpack.c.bf16 %v1769, %v1769
          %v1877 = vpack.c.bf16 %v1770, %v1770
          %v1878 = vpack.c.bf16 %v1771, %v1771
          %v1879 = vpack.c.bf16 %v1772, %v1772
          %v1880 = vpack.c.bf16 %v1773, %v1773
          %v1881 = vpack.c.bf16 %v1774, %v1774
          %v1882 = vpack.c.bf16 %v1775, %v1775
          %v1883 = vpack.c.bf16 %v1776, %v1776
          %v1884 = vpack.c.bf16 %v1777, %v1777
          %v1885 = vpack.c.bf16 %v1778, %v1778
          %v1886 = vpack.c.bf16 %v1779, %v1779
          %v1887 = vpack.c.bf16 %v1780, %v1780
          %v1888 = vpack.c.bf16 %v1781, %v1781
          %v1889 = vpack.c.bf16 %v1782, %v1782
          %v1890 = vpack.c.bf16 %v1783, %v1783
          %v1891 = vpack.c.bf16 %v1784, %v1784
          %v1892 = vpack.c.bf16 %v1785, %v1785
          %v1893 = vpack.c.bf16 %v1786, %v1786
          %v1894 = vpack.c.bf16 %v1787, %v1787
          %v1895 = vpack.c.bf16 %v1788, %v1788
          %v1896 = vpack.c.bf16 %v1789, %v1789
          %v1897 = vpack.c.bf16 %v1790, %v1790
          %v1898 = vpack.c.bf16 %v1791, %v1791
          %v1899 = vpack.c.bf16 %v1792, %v1792
          %v1900 = vpack.c.bf16 %v1793, %v1793
          %v1901 = vpack.c.bf16 %v1794, %v1794
          %v1902 = vpack.c.bf16 %v1795, %v1795
          %v1903 = vpack.c.bf16 %v1796, %v1796
          %1904 = vst [vmem:[%s262] sm:$0xf] %v1797
          %1905 = vst [vmem:[%s262 + $0x4] sm:$0xf] %v1798
          %1906 = vst [vmem:[%s262 + $0x8] sm:$0xf] %v1799
          %1907 = vst [vmem:[%s262 + $0xc] sm:$0xf] %v1800
          %1908 = vst [vmem:[%s262 + $0x10] sm:$0xf] %v1801
          %1909 = vst [vmem:[%s262 + $0x14] sm:$0xf] %v1802
          %1910 = vst [vmem:[%s262 + $0x18] sm:$0xf] %v1803
          %1911 = vst [vmem:[%s262 + $0x1c] sm:$0xf] %v1804
          %1912 = vst [vmem:[%s262 + $0x20] sm:$0xf] %v1805
          %1913 = vst [vmem:[%s262 + $0x24] sm:$0xf] %v1806
          %1914 = vst [vmem:[%s262 + $0x28] sm:$0xf] %v1807
          %1915 = vst [vmem:[%s262 + $0x2c] sm:$0xf] %v1808
          %1916 = vst [vmem:[%s262 + $0x30] sm:$0xf] %v1809
          %1917 = vst [vmem:[%s262 + $0x34] sm:$0xf] %v1810
          %1918 = vst [vmem:[%s262 + $0x38] sm:$0xf] %v1811
          %1919 = vst [vmem:[%s262 + $0x3c] sm:$0xf] %v1812
          %1920 = vst [vmem:[%s262 + $0x40] sm:$0xf] %v1813
          %1921 = vst [vmem:[%s262 + $0x44] sm:$0xf] %v1814
          %1922 = vst [vmem:[%s262 + $0x48] sm:$0xf] %v1815
          %1923 = vst [vmem:[%s262 + $0x4c] sm:$0xf] %v1816
          %1924 = vst [vmem:[%s262 + $0x50] sm:$0xf] %v1817
          %1925 = vst [vmem:[%s262 + $0x54] sm:$0xf] %v1818
          %1926 = vst [vmem:[%s262 + $0x58] sm:$0xf] %v1819
          %1927 = vst [vmem:[%s262 + $0x5c] sm:$0xf] %v1820
          %1928 = vst [vmem:[%s262 + $0x60] sm:$0xf] %v1821
          %1929 = vst [vmem:[%s262 + $0x64] sm:$0xf] %v1822
          %1930 = vst [vmem:[%s262 + $0x68] sm:$0xf] %v1823
          %1931 = vst [vmem:[%s262 + $0x6c] sm:$0xf] %v1824
          %1932 = vst [vmem:[%s262 + $0x70] sm:$0xf] %v1825
          %1933 = vst [vmem:[%s262 + $0x74] sm:$0xf] %v1826
          %1934 = vst [vmem:[%s262 + $0x78] sm:$0xf] %v1827
          %1935 = vst [vmem:[%s262 + $0x7c] sm:$0xf] %v1828
          %1936 = vst [vmem:[%s262 + $0x80] sm:$0xf] %v1829
          %1937 = vst [vmem:[%s262 + $0x84] sm:$0xf] %v1830
          %1938 = vst [vmem:[%s262 + $0x88] sm:$0xf] %v1831
          %1939 = vst [vmem:[%s262 + $0x8c] sm:$0xf] %v1832
          %1940 = vst [vmem:[%s262 + $0x90] sm:$0xf] %v1833
          %1941 = vst [vmem:[%s262 + $0x94] sm:$0xf] %v1834
          %1942 = vst [vmem:[%s262 + $0x98] sm:$0xf] %v1835
          %1943 = vst [vmem:[%s262 + $0x9c] sm:$0xf] %v1836
          %1944 = vst [vmem:[%s262 + $0xa0] sm:$0xf] %v1837
          %1945 = vst [vmem:[%s262 + $0xa4] sm:$0xf] %v1838
          %1946 = vst [vmem:[%s262 + $0xa8] sm:$0xf] %v1839
          %1947 = vst [vmem:[%s262 + $0xac] sm:$0xf] %v1840
          %1948 = vst [vmem:[%s262 + $0xb0] sm:$0xf] %v1841
          %1949 = vst [vmem:[%s262 + $0xb4] sm:$0xf] %v1842
          %1950 = vst [vmem:[%s262 + $0xb8] sm:$0xf] %v1843
          %1951 = vst [vmem:[%s262 + $0xbc] sm:$0xf] %v1844
          %1952 = vst [vmem:[%s262 + $0xc0] sm:$0xf] %v1845
          %1953 = vst [vmem:[%s262 + $0xc4] sm:$0xf] %v1846
          %1954 = vst [vmem:[%s262 + $0xc8] sm:$0xf] %v1847
          %1955 = vst [vmem:[%s262 + $0xcc] sm:$0xf] %v1848
          %1956 = vst [vmem:[%s262 + $0xd0] sm:$0xf] %v1849
          %1957 = vst [vmem:[%s262 + $0xd4] sm:$0xf] %v1850
          %1958 = vst [vmem:[%s262 + $0xd8] sm:$0xf] %v1851
          %1959 = vst [vmem:[%s262 + $0xdc] sm:$0xf] %v1852
          %1960 = vst [vmem:[%s262 + $0xe0] sm:$0xf] %v1853
          %1961 = vst [vmem:[%s262 + $0xe4] sm:$0xf] %v1854
          %1962 = vst [vmem:[%s262 + $0xe8] sm:$0xf] %v1855
          %1963 = vst [vmem:[%s262 + $0xec] sm:$0xf] %v1856
          %1964 = vst [vmem:[%s262 + $0xf0] sm:$0xf] %v1857
          %1965 = vst [vmem:[%s262 + $0xf4] sm:$0xf] %v1858
          %1966 = vst [vmem:[%s262 + $0xf8] sm:$0xf] %v1859
          %1967 = vst [vmem:[%s262 + $0xfc] sm:$0xf] %v1860
          %1968 = vst [vmem:[%s262 + $0x100] sm:$0xf] %v1861
          %1969 = vst [vmem:[%s262 + $0x104] sm:$0xf] %v1862
          %1970 = vst [vmem:[%s262 + $0x108] sm:$0xf] %v1863
          %1971 = vst [vmem:[%s262 + $0x10c] sm:$0xf] %v1864
          %1972 = vst [vmem:[%s262 + $0x110] sm:$0xf] %v1865
          %1973 = vst [vmem:[%s262 + $0x114] sm:$0xf] %v1866
          %1974 = vst [vmem:[%s262 + $0x118] sm:$0xf] %v1867
          %1975 = vst [vmem:[%s262 + $0x11c] sm:$0xf] %v1868
          %1976 = vst [vmem:[%s262 + $0x120] sm:$0xf] %v1869
          %1977 = vst [vmem:[%s262 + $0x124] sm:$0xf] %v1870
          %1978 = vst [vmem:[%s262 + $0x128] sm:$0xf] %v1871
          %1979 = vst [vmem:[%s262 + $0x12c] sm:$0xf] %v1872
          %1980 = vst [vmem:[%s262 + $0x130] sm:$0xf] %v1873
          %1981 = vst [vmem:[%s262 + $0x134] sm:$0xf] %v1874
          %1982 = vst [vmem:[%s262 + $0x138] sm:$0xf] %v1875
          %1983 = vst [vmem:[%s262 + $0x13c] sm:$0xf] %v1876
          %1984 = vst [vmem:[%s262 + $0x140] sm:$0xf] %v1877
          %1985 = vst [vmem:[%s262 + $0x144] sm:$0xf] %v1878
          %1986 = vst [vmem:[%s262 + $0x148] sm:$0xf] %v1879
          %1987 = vst [vmem:[%s262 + $0x14c] sm:$0xf] %v1880
          %1988 = vst [vmem:[%s262 + $0x150] sm:$0xf] %v1881
          %1989 = vst [vmem:[%s262 + $0x154] sm:$0xf] %v1882
          %1990 = vst [vmem:[%s262 + $0x158] sm:$0xf] %v1883
          %1991 = vst [vmem:[%s262 + $0x15c] sm:$0xf] %v1884
          %1992 = vst [vmem:[%s262 + $0x160] sm:$0xf] %v1885
          %1993 = vst [vmem:[%s262 + $0x164] sm:$0xf] %v1886
          %1994 = vst [vmem:[%s262 + $0x168] sm:$0xf] %v1887
          %1995 = vst [vmem:[%s262 + $0x16c] sm:$0xf] %v1888
          %1996 = vst [vmem:[%s262 + $0x170] sm:$0xf] %v1889
          %1997 = vst [vmem:[%s262 + $0x174] sm:$0xf] %v1890
          %1998 = vst [vmem:[%s262 + $0x178] sm:$0xf] %v1891
          %1999 = vst [vmem:[%s262 + $0x17c] sm:$0xf] %v1892
          %2000 = vst [vmem:[%s262 + $0x180] sm:$0xf] %v1893
          %2001 = vst [vmem:[%s262 + $0x184] sm:$0xf] %v1894
          %2002 = vst [vmem:[%s262 + $0x188] sm:$0xf] %v1895
          %2003 = vst [vmem:[%s262 + $0x18c] sm:$0xf] %v1896
          %2004 = vst [vmem:[%s262 + $0x190] sm:$0xf] %v1897
          %2005 = vst [vmem:[%s262 + $0x194] sm:$0xf] %v1898
          %2006 = vst [vmem:[%s262 + $0x198] sm:$0xf] %v1899
          %2007 = vst [vmem:[%s262 + $0x19c] sm:$0xf] %v1900
          %2008 = vst [vmem:[%s262 + $0x1a0] sm:$0xf] %v1901
          %2009 = vst [vmem:[%s262 + $0x1a4] sm:$0xf] %v1902
          %2010 = vst [vmem:[%s262 + $0x1a8] sm:$0xf] %v1903
        $region52: #{tpu_custom_call.1} parent=31 // pred_fallthru
          _
        %s2011 = sand.u32 %s132, 1
        %s2012 = scalar_lea.sflag [#allocation5], %s2011
        %s2013 = sand.u32 %s132, 1
        %s2014 = smul.addr %s2013, 428
        %s2015 = scalar_lea.vmem [#allocation9], %s2014
        // Predicated region
        $region53: #{tpu_custom_call.1} parent=31 // pred_check
          %p2016 = pneg %p142
        $region54: #{tpu_custom_call.1} parent=31 // pred_check_branch
          %2018 = sbr.rel (%p2016) target = $region56
        $region55: #{tpu_custom_call.1} parent=31 // pred_region
          %s2019 = smul.u32 107, %s26
          %2021 = vsyncadd %s2012, 0
          %s2022 = sadd.s32 %s27, %s2019
          %s2023 = smul.addr %s2022, 4
          %s2024 = scalar_lea.hbm %s3, %s2023
          %s2025 = sshll.u32 %s2015, 4
          %s2026 = int_to_ptr.vmem [resolvable:$true] %s2025
          %s2027 = sshll.u32 %s2024, 4
          %s2028 = int_to_ptr.hbm [resolvable:$true] %s2027
          %2033 = dma.vmem_to_hbm [thread:$0]  %s2026, 6848, %s2028, %s2012, 64, 64, 4
        $region56: #{tpu_custom_call.1} parent=31 // pred_fallthru
          _
      $region32: #{tpu_custom_call.1} parent=5 // pred_fallthru
        _
      %p2034 = scmp.le.s32.totalorder 2, %s16
      // Predicated region
      $region57: #{tpu_custom_call.1} parent=5 // pred_check
        %p2035 = pneg %p2034
      $region58: #{tpu_custom_call.1} parent=5 // pred_check_branch
        %2037 = sbr.rel (%p2035) target = $region60
      $region59: #{tpu_custom_call.1} parent=5 // pred_region
        %s2038 = ssub.s32 %s16, 2
        // Predicated region
        $region61: #{tpu_custom_call.1} parent=59 // pred_check
          %p2039 = pneg %p148
        $region62: #{tpu_custom_call.1} parent=59 // pred_check_branch
          %2041 = sbr.rel (%p2039) target = $region64
        $region63: #{tpu_custom_call.1} parent=59 // pred_region
          %s2042 = sand.u32 %s133, 1
          %s2043 = scalar_lea.sflag [#allocation5], %s2042
          %s2044 = sand.u32 %s133, 1
          %s2045 = smul.addr %s2044, 428
          %s2046 = scalar_lea.vmem [#allocation9], %s2045
          %2048 = dma.done %s2043, 6848
        $region64: #{tpu_custom_call.1} parent=59 // pred_fallthru
          _
      $region60: #{tpu_custom_call.1} parent=5 // pred_fallthru
        _
    $region6: #{tpu_custom_call.1} parent=1 // loop_footer
      %s20 = sadd.s32 1, %s16
    $region7: #{tpu_custom_call.1} parent=1 // loop_footer_branch
      %15 = sbr.rel target = $region3
    $region8: #{tpu_custom_call.1} parent=1 // loop_exit
      _
    %2049 = vsyncpa [#allocation4], 1
    %s2050 = scalar_lea.sflag [#allocation4], 1
    %2051 = vsyncpa %s2050, 1
    %2052 = vsyncpa [#allocation7], 1
    %2053 = vsyncpa [#allocation5], 1
    %s2054 = scalar_lea.sflag [#allocation5], 1
    %2055 = vsyncpa %s2054, 1

</llo_original>
